<compile_context>
chip_gen: v7x
topology: tpu7x:2x2x1
jax: 0.10.0
libtpu: 0.0.40
codegen_flags: <defaults>
</compile_context>

<pallas_src>
import functools

import numpy as np
import jax
import jax.numpy as jnp
from jax import lax
from jax.experimental import pallas as pl
from jax.experimental.pallas import tpu as pltpu


def _fused_kernel(x_ref, sc0_ref, sh0_ref, sc1_ref, sh1_ref,
                  wtap_ref, bconv_ref, seg_ref, segT_ref, mask_ref,
                  o_ref, ypad_ref, *, C, H, W, PAD):
    """Per-sample fused AdaIN -> 3x3 conv -> AdaIN, all in VMEM.

    x_ref:    (1, C, H*W)   lane-dense activation for this sample
    sc*/sh*:  (1, C, 1)     per-sample style scale / shift (precomputed in glue)
    wtap_ref: (9, C, C)     conv taps, tap t = (kh*3 + kw), equalizer folded in
    bconv_ref:(C, 1)        conv bias
    seg_ref:  (H*W, H)      0/1 segment-sum matrix   (sum over W per row h)
    segT_ref: (H, H*W)      its transpose            (broadcast per-row values)
    mask_ref: (9, 1, H*W)   per-tap validity masks (kill row/column wrap)
    ypad_ref: (C, 2*PAD+HW) scratch: zero-padded line buffer for the conv
    """
    HW = H * W
    x = x_ref[0].astype(jnp.float32)          # (C, HW)
    seg = seg_ref[...]                        # (HW, H)
    segT = segT_ref[...]                      # (H, HW)

    def adain(v, scale, shift):
        # mean(dim=-1).mean(dim=-1).mean(dim=-1) over equal dims == global mean
        mn = jnp.mean(jnp.mean(v, axis=1, keepdims=True), axis=0, keepdims=True)
        # std over W per (c, h), unbiased (ddof=1), via segment sums (no reshape)
        mu1 = jnp.dot(v, seg, preferred_element_type=jnp.float32) * (1.0 / W)      # (C, H)
        d1 = v - jnp.dot(mu1, segT, preferred_element_type=jnp.float32)            # (C, HW)
        var1 = jnp.dot(d1 * d1, seg,
                       preferred_element_type=jnp.float32) * (1.0 / (W - 1))       # (C, H)
        s1 = jnp.sqrt(var1)
        # std over H of s1 (ddof=1)
        e1 = s1 - jnp.mean(s1, axis=1, keepdims=True)
        s2 = jnp.sqrt(jnp.sum(e1 * e1, axis=1, keepdims=True) * (1.0 / (H - 1)))   # (C, 1)
        # std over C of s2 (ddof=1); keep the variance (== std**2) directly
        e2 = s2 - jnp.mean(s2, axis=0, keepdims=True)
        var3 = jnp.sum(e2 * e2, axis=0, keepdims=True) * (1.0 / (C - 1))           # (1, 1)
        inv = lax.rsqrt(var3 + 1e-8)          # 1/sqrt(std**2 + 1e-8)   (EUP rsqrt)
        return (v - mn) * inv * scale + shift

    # ------------------------------ AdaIN #0 -------------------------------
    y0 = adain(x, sc0_ref[0], sh0_ref[0])

    # -------- 3x3 conv (padding=1) as 9 shift-and-accumulate matmuls --------
    # Zero-padded line buffer (zeroed every step: correct under megacore split).
    ypad_ref[...] = jnp.zeros_like(ypad_ref)
    ypad_ref[:, PAD:PAD + HW] = y0            # aligned store (PAD is a mult. of 128)
    acc = jnp.zeros((C, HW), jnp.float32)
    for t in range(9):                        # static unroll over the 9 taps
        dh, dw = t // 3 - 1, t % 3 - 1
        off = PAD + dh * W + dw               # static lane offset
        shifted = ypad_ref[:, off:off + HW] * mask_ref[t]      # mask row wrap
        acc = acc + jnp.dot(wtap_ref[t], shifted,
                            preferred_element_type=jnp.float32)
    y1 = acc + bconv_ref[...]                 # (C, HW)

    # ------------------------------ AdaIN #1 -------------------------------
    out = adain(y1, sc1_ref[0], sh1_ref[0])
    o_ref[0] = out.astype(o_ref.dtype)


def sequential_with_adain(x, w, params):
    """x: (N, C, H, W) f32 activations, w: (N, L) f32 latent vectors."""
    N, C, H, W_ = x.shape
    L = w.shape[1]
    HW = H * W_
    PAD = ((W_ + 1 + 127) // 128) * 128       # aligned zero pad, >= W + 1

    # ---- tiny style linears hoisted out of the hot kernel (per review) ----
    c_lin = float(np.sqrt(2.0 / L))           # EqualizingWrapper scale for Linear
    def style(lin_w, lin_b):
        y = jnp.dot(w, (c_lin * lin_w).T) + lin_b          # (N, 2C)
        return y[:, :C].reshape(N, C, 1), y[:, C:].reshape(N, C, 1)
    sc0, sh0 = style(params["adain0_w"], params["adain0_b"])
    sc1, sh1 = style(params["adain1_w"], params["adain1_b"])

    # ---- conv weights as 9 (Cout, Cin) taps (equalizer scale folded in) ----
    c_conv = float(np.sqrt(2.0 / (C * 9)))    # EqualizingWrapper scale for Conv2d
    wtaps = (params["conv_w"] * c_conv).transpose(2, 3, 0, 1).reshape(9, C, C)
    bconv = params["conv_b"].reshape(C, 1)

    # ---- constant helpers: segment-sum matrices + per-tap validity masks ---
    hh = np.arange(HW) // W_
    ww = np.arange(HW) % W_
    seg = (hh[:, None] == np.arange(H)[None, :]).astype(np.float32)     # (HW, H)
    segT = np.ascontiguousarray(seg.T)                                  # (H, HW)
    masks = np.zeros((9, 1, HW), np.float32)
    for t in range(9):
        dh, dw = t // 3 - 1, t % 3 - 1
        ok = (hh + dh >= 0) & (hh + dh < H) & (ww + dw >= 0) & (ww + dw < W_)
        masks[t, 0] = ok.astype(np.float32)

    x_flat = x.reshape(N, C, HW)              # metadata-only reshape (no transpose)

    kernel = functools.partial(_fused_kernel, C=C, H=H, W=W_, PAD=PAD)

    flops = N * (2 * C * C * 9 * HW           # conv MACs * 2
                 + 2 * (6 * C * HW * H)       # segment-sum matmuls, both AdaINs
                 + 2 * (10 * C * HW))         # elementwise work
    cost = pl.CostEstimate(
        flops=int(flops),
        transcendentals=int(N * 2 * (C * H + C + 1)),
        bytes_accessed=int(2 * N * C * HW * 4 + 9 * C * C * 4 + 4 * N * C * 4),
    )

    grid_spec = pltpu.PrefetchScalarGridSpec(
        num_scalar_prefetch=0,
        grid=(N,),
        in_specs=[
            pl.BlockSpec((1, C, HW), lambda n: (n, 0, 0)),     # x  (per sample)
            pl.BlockSpec((1, C, 1), lambda n: (n, 0, 0)),      # scale0
            pl.BlockSpec((1, C, 1), lambda n: (n, 0, 0)),      # shift0
            pl.BlockSpec((1, C, 1), lambda n: (n, 0, 0)),      # scale1
            pl.BlockSpec((1, C, 1), lambda n: (n, 0, 0)),      # shift1
            pl.BlockSpec((9, C, C), lambda n: (0, 0, 0)),      # conv taps
            pl.BlockSpec((C, 1), lambda n: (0, 0)),            # conv bias
            pl.BlockSpec((HW, H), lambda n: (0, 0)),           # segment-sum matrix
            pl.BlockSpec((H, HW), lambda n: (0, 0)),           # its transpose
            pl.BlockSpec((9, 1, HW), lambda n: (0, 0, 0)),     # tap masks
        ],
        out_specs=pl.BlockSpec((1, C, HW), lambda n: (n, 0, 0)),
        scratch_shapes=[pltpu.VMEM((C, 2 * PAD + HW), jnp.float32)],
    )

    out_flat = pl.pallas_call(
        kernel,
        out_shape=jax.ShapeDtypeStruct((N, C, HW), x.dtype),
        grid_spec=grid_spec,
        compiler_params=pltpu.CompilerParams(
            dimension_semantics=("parallel",),   # samples shard across TCs (v7x)
            vmem_limit_bytes=64 << 20,
        ),
        cost_estimate=cost,
    )(x_flat, sc0, sh0, sc1, sh1,
      jnp.asarray(wtaps), jnp.asarray(bconv),
      jnp.asarray(seg), jnp.asarray(segT), jnp.asarray(masks))

    return out_flat.reshape(N, C, H, W_)


if __name__ == "__main__":
    N, C, H, W_, L = 2, 4, 16, 16, 8

    key = jax.random.PRNGKey(0)
    kx, kw, k1, k2, k3, k4 = jax.random.split(key, 6)

    x = jax.random.normal(kx, (N, C, H, W_), jnp.float32)
    w = jax.random.normal(kw, (N, L), jnp.float32)

    params = {
        # AdaIN3D linear: weight ~ normal, bias filled with 1.0
        "adain0_w": jax.random.normal(k1, (2 * C, L), jnp.float32),
        "adain0_b": jnp.ones((2 * C,), jnp.float32),
        "adain1_w": jax.random.normal(k2, (2 * C, L), jnp.float32),
        "adain1_b": jnp.ones((2 * C,), jnp.float32),
        # Conv2d(C, C, 3, padding=1): weight ~ normal, bias arbitrary
        "conv_w": jax.random.normal(k3, (C, C, 3, 3), jnp.float32),
        "conv_b": 0.1 * jax.random.normal(k4, (C,), jnp.float32),
    }

    out = jax.jit(sequential_with_adain)(x, w, params)
    out = jax.block_until_ready(out)
    assert out.shape == (N, C, H, W_) and out.dtype == jnp.float32

    # ---- float64 numpy reference implementing the exact torch semantics ----
    def ref_forward(x_in, w_in, p_in):
        xr = np.asarray(x_in, np.float64)
        wr = np.asarray(w_in, np.float64)
        p = {k: np.asarray(v, np.float64) for k, v in p_in.items()}
        Cc, Ll = xr.shape[1], wr.shape[1]

        def adain(v, lw, lb):
            mean = v.mean(-1).mean(-1).mean(-1)[:, None, None, None]
            std = v.std(-1, ddof=1).std(-1, ddof=1).std(-1, ddof=1)[:, None, None, None]
            vn = (v - mean) / np.sqrt(std ** 2 + 1e-8)
            y = wr @ (np.sqrt(2.0 / Ll) * lw).T + lb
            return vn * y[:, :Cc][:, :, None, None] + y[:, Cc:][:, :, None, None]

        def conv3x3(v, cw, cb):
            c = np.sqrt(2.0 / (Cc * 9))
            vp = np.pad(v, ((0, 0), (0, 0), (1, 1), (1, 1)))
            Hh, Ww = v.shape[2], v.shape[3]
            pat = np.stack([vp[:, :, kh:kh + Hh, kw:kw + Ww]
                            for kh in range(3) for kw in range(3)], axis=2)
            return (np.einsum("oci,ncihw->nohw", (cw * c).reshape(Cc, Cc, 9), pat)
                    + cb[None, :, None, None])

        v = adain(xr, p["adain0_w"], p["adain0_b"])
        v = conv3x3(v, p["conv_w"], p["conv_b"])
        v = adain(v, p["adain1_w"], p["adain1_b"])
        return v

    ref = ref_forward(x, w, params)
    # Loose tolerance: guards kernel structure (taps/masks/scale-shift wiring)
    # while tolerating MXU f32-matmul rounding behavior differences across TPUs.
    rel_err = np.max(np.abs(np.asarray(out, np.float64) - ref)) / (np.max(np.abs(ref)) + 1e-12)
    assert rel_err < 5e-2, f"numerical mismatch vs reference: rel_err={rel_err:.3e}"

    print("KERNEL_OK")
</pallas_src>

<mosaic_0001>
module attributes {stable_mosaic.version = 11 : i64} {
  func.func @_fused_kernel(%arg0: i32, %arg1: memref<1x4x256xf32, #tpu.memory_space<vmem>>, %arg2: memref<1x4x1xf32, #tpu.memory_space<vmem>>, %arg3: memref<1x4x1xf32, #tpu.memory_space<vmem>>, %arg4: memref<1x4x1xf32, #tpu.memory_space<vmem>>, %arg5: memref<1x4x1xf32, #tpu.memory_space<vmem>>, %arg6: memref<9x4x4xf32, #tpu.memory_space<vmem>>, %arg7: memref<4x1xf32, #tpu.memory_space<vmem>>, %arg8: memref<256x16xf32, #tpu.memory_space<vmem>>, %arg9: memref<16x256xf32, #tpu.memory_space<vmem>>, %arg10: memref<9x1x256xf32, #tpu.memory_space<vmem>>, %arg11: memref<1x4x256xf32, #tpu.memory_space<vmem>>, %arg12: memref<4x512xf32, #tpu.memory_space<vmem>>) attributes {dimension_semantics = [#tpu.dimension_semantics<parallel>], iteration_bounds = array<i64: 2>, scalar_prefetch = 0 : i64, scratch_operands = 1 : i64, tpu.core_type = #tpu.core_type<tc>, window_params = [{transform_indices = @transform_0, window_bounds = array<i64: 1, 4, 256>}, {transform_indices = @transform_1, window_bounds = array<i64: 1, 4, 1>}, {transform_indices = @transform_2, window_bounds = array<i64: 1, 4, 1>}, {transform_indices = @transform_3, window_bounds = array<i64: 1, 4, 1>}, {transform_indices = @transform_4, window_bounds = array<i64: 1, 4, 1>}, {pipeline_mode = #tpu.pipeline_mode<synchronous>, transform_indices = @transform_5, window_bounds = array<i64: 9, 4, 4>}, {pipeline_mode = #tpu.pipeline_mode<synchronous>, transform_indices = @transform_6, window_bounds = array<i64: 4, 1>}, {pipeline_mode = #tpu.pipeline_mode<synchronous>, transform_indices = @transform_7, window_bounds = array<i64: 256, 16>}, {pipeline_mode = #tpu.pipeline_mode<synchronous>, transform_indices = @transform_8, window_bounds = array<i64: 16, 256>}, {pipeline_mode = #tpu.pipeline_mode<synchronous>, transform_indices = @transform_9, window_bounds = array<i64: 9, 1, 256>}, {transform_indices = @transform_10, window_bounds = array<i64: 1, 4, 256>}]} {
    %c0 = arith.constant 0 : index
    %c0_0 = arith.constant 0 : index
    %c0_1 = arith.constant 0 : index
    %0 = vector.load %arg1[%c0, %c0_0, %c0_1] : memref<1x4x256xf32, #tpu.memory_space<vmem>>, vector<1x4x256xf32>
    %1 = vector.shape_cast %0 : vector<1x4x256xf32> to vector<4x256xf32>
    %c0_2 = arith.constant 0 : index
    %c0_3 = arith.constant 0 : index
    %2 = vector.load %arg8[%c0_2, %c0_3] : memref<256x16xf32, #tpu.memory_space<vmem>>, vector<256x16xf32>
    %c0_4 = arith.constant 0 : index
    %c0_5 = arith.constant 0 : index
    %3 = vector.load %arg9[%c0_4, %c0_5] : memref<16x256xf32, #tpu.memory_space<vmem>>, vector<16x256xf32>
    %c0_6 = arith.constant 0 : index
    %c0_7 = arith.constant 0 : index
    %c0_8 = arith.constant 0 : index
    %4 = vector.load %arg2[%c0_6, %c0_7, %c0_8] : memref<1x4x1xf32, #tpu.memory_space<vmem>>, vector<1x4x1xf32>
    %5 = vector.shape_cast %4 : vector<1x4x1xf32> to vector<4x1xf32>
    %c0_9 = arith.constant 0 : index
    %c0_10 = arith.constant 0 : index
    %c0_11 = arith.constant 0 : index
    %6 = vector.load %arg3[%c0_9, %c0_10, %c0_11] : memref<1x4x1xf32, #tpu.memory_space<vmem>>, vector<1x4x1xf32>
    %7 = vector.shape_cast %6 : vector<1x4x1xf32> to vector<4x1xf32>
    %cst = arith.constant dense<0.000000e+00> : vector<4xf32>
    %8 = vector.multi_reduction <add>, %1, %cst [1] : vector<4x256xf32> to vector<4xf32>
    %9 = vector.shape_cast %8 : vector<4xf32> to vector<4x1xf32>
    %cst_12 = arith.constant 2.560000e+02 : f32
    %10 = vector.broadcast %cst_12 : f32 to vector<4x1xf32>
    %11 = arith.divf %9, %10 : vector<4x1xf32>
    %cst_13 = arith.constant dense<0.000000e+00> : vector<1xf32>
    %12 = vector.multi_reduction <add>, %11, %cst_13 [0] : vector<4x1xf32> to vector<1xf32>
    %13 = vector.shape_cast %12 : vector<1xf32> to vector<1x1xf32>
    %cst_14 = arith.constant 4.000000e+00 : f32
    %14 = vector.broadcast %cst_14 : f32 to vector<1x1xf32>
    %15 = arith.divf %13, %14 : vector<1x1xf32>
    %cst_15 = arith.constant dense<0.000000e+00> : vector<4x16xf32>
    %16 = tpu.matmul %1, %2, %cst_15 {dimension_numbers = #tpu.dot_dimension_numbers<[1], [0], [0], [1], [0, 0, 1, 1], [], []>} : vector<4x256xf32>, vector<256x16xf32>, vector<4x16xf32> -> vector<4x16xf32>
    %cst_16 = arith.constant 6.250000e-02 : f32
    %17 = vector.broadcast %cst_16 : f32 to vector<4x16xf32>
    %18 = arith.mulf %16, %17 : vector<4x16xf32>
    %cst_17 = arith.constant dense<0.000000e+00> : vector<4x256xf32>
    %19 = tpu.matmul %18, %3, %cst_17 {dimension_numbers = #tpu.dot_dimension_numbers<[1], [0], [0], [1], [0, 0, 1, 1], [], []>} : vector<4x16xf32>, vector<16x256xf32>, vector<4x256xf32> -> vector<4x256xf32>
    %20 = arith.subf %1, %19 : vector<4x256xf32>
    %21 = arith.mulf %20, %20 : vector<4x256xf32>
    %cst_18 = arith.constant dense<0.000000e+00> : vector<4x16xf32>
    %22 = tpu.matmul %21, %2, %cst_18 {dimension_numbers = #tpu.dot_dimension_numbers<[1], [0], [0], [1], [0, 0, 1, 1], [], []>} : vector<4x256xf32>, vector<256x16xf32>, vector<4x16xf32> -> vector<4x16xf32>
    %cst_19 = arith.constant 0.0666666701 : f32
    %23 = vector.broadcast %cst_19 : f32 to vector<4x16xf32>
    %24 = arith.mulf %22, %23 : vector<4x16xf32>
    %25 = math.sqrt %24 : vector<4x16xf32>
    %cst_20 = arith.constant dense<0.000000e+00> : vector<4xf32>
    %26 = vector.multi_reduction <add>, %25, %cst_20 [1] : vector<4x16xf32> to vector<4xf32>
    %27 = vector.shape_cast %26 : vector<4xf32> to vector<4x1xf32>
    %cst_21 = arith.constant 1.600000e+01 : f32
    %28 = vector.broadcast %cst_21 : f32 to vector<4x1xf32>
    %29 = arith.divf %27, %28 : vector<4x1xf32>
    %30 = vector.broadcast %29 : vector<4x1xf32> to vector<4x16xf32>
    %31 = arith.subf %25, %30 : vector<4x16xf32>
    %32 = arith.mulf %31, %31 : vector<4x16xf32>
    %cst_22 = arith.constant dense<0.000000e+00> : vector<4xf32>
    %33 = vector.multi_reduction <add>, %32, %cst_22 [1] : vector<4x16xf32> to vector<4xf32>
    %34 = vector.shape_cast %33 : vector<4xf32> to vector<4x1xf32>
    %cst_23 = arith.constant 0.0666666701 : f32
    %35 = vector.broadcast %cst_23 : f32 to vector<4x1xf32>
    %36 = arith.mulf %34, %35 : vector<4x1xf32>
    %37 = math.sqrt %36 : vector<4x1xf32>
    %cst_24 = arith.constant dense<0.000000e+00> : vector<1xf32>
    %38 = vector.multi_reduction <add>, %37, %cst_24 [0] : vector<4x1xf32> to vector<1xf32>
    %39 = vector.shape_cast %38 : vector<1xf32> to vector<1x1xf32>
    %cst_25 = arith.constant 4.000000e+00 : f32
    %40 = vector.broadcast %cst_25 : f32 to vector<1x1xf32>
    %41 = arith.divf %39, %40 : vector<1x1xf32>
    %42 = vector.broadcast %41 : vector<1x1xf32> to vector<4x1xf32>
    %43 = arith.subf %37, %42 : vector<4x1xf32>
    %44 = arith.mulf %43, %43 : vector<4x1xf32>
    %cst_26 = arith.constant dense<0.000000e+00> : vector<1xf32>
    %45 = vector.multi_reduction <add>, %44, %cst_26 [0] : vector<4x1xf32> to vector<1xf32>
    %46 = vector.shape_cast %45 : vector<1xf32> to vector<1x1xf32>
    %cst_27 = arith.constant 0.333333343 : f32
    %47 = vector.broadcast %cst_27 : f32 to vector<1x1xf32>
    %48 = arith.mulf %46, %47 : vector<1x1xf32>
    %cst_28 = arith.constant 9.99999993E-9 : f32
    %49 = vector.broadcast %cst_28 : f32 to vector<1x1xf32>
    %50 = arith.addf %48, %49 : vector<1x1xf32>
    %51 = math.rsqrt %50 : vector<1x1xf32>
    %52 = vector.broadcast %15 : vector<1x1xf32> to vector<4x256xf32>
    %53 = arith.subf %1, %52 : vector<4x256xf32>
    %54 = vector.broadcast %51 : vector<1x1xf32> to vector<4x256xf32>
    %55 = arith.mulf %53, %54 : vector<4x256xf32>
    %56 = vector.broadcast %5 : vector<4x1xf32> to vector<4x256xf32>
    %57 = arith.mulf %55, %56 : vector<4x256xf32>
    %58 = vector.broadcast %7 : vector<4x1xf32> to vector<4x256xf32>
    %59 = arith.addf %57, %58 : vector<4x256xf32>
    %cst_29 = arith.constant 0.000000e+00 : f32
    %60 = vector.broadcast %cst_29 : f32 to vector<4x512xf32>
    %c0_30 = arith.constant 0 : index
    %c0_31 = arith.constant 0 : index
    %61 = vector.load %arg12[%c0_30, %c0_31] : memref<4x512xf32, #tpu.memory_space<vmem>>, vector<4x512xf32>
    tpu.vector_store %arg12[%c0_30, %c0_31], %60 {strides = array<i32>} : memref<4x512xf32, #tpu.memory_space<vmem>>, vector<4x512xf32>,
    %c0_32 = arith.constant 0 : index
    %c128 = arith.constant 128 : index
    %62 = vector.load %arg12[%c0_32, %c128] : memref<4x512xf32, #tpu.memory_space<vmem>>, vector<4x256xf32>
    tpu.vector_store %arg12[%c0_32, %c128], %59 {strides = array<i32>} : memref<4x512xf32, #tpu.memory_space<vmem>>, vector<4x256xf32>,
    %cst_33 = arith.constant 0.000000e+00 : f32
    %63 = vector.broadcast %cst_33 : f32 to vector<4x256xf32>
    %c0_34 = arith.constant 0 : index
    %c111 = arith.constant 111 : index
    %64 = vector.load %arg12[%c0_34, %c111] : memref<4x512xf32, #tpu.memory_space<vmem>>, vector<4x256xf32>
    %c0_35 = arith.constant 0 : index
    %c0_36 = arith.constant 0 : index
    %c0_37 = arith.constant 0 : index
    %65 = vector.load %arg10[%c0_35, %c0_36, %c0_37] : memref<9x1x256xf32, #tpu.memory_space<vmem>>, vector<1x1x256xf32>
    %66 = vector.shape_cast %65 : vector<1x1x256xf32> to vector<1x256xf32>
    %67 = vector.broadcast %66 : vector<1x256xf32> to vector<4x256xf32>
    %68 = arith.mulf %64, %67 : vector<4x256xf32>
    %c0_38 = arith.constant 0 : index
    %c0_39 = arith.constant 0 : index
    %c0_40 = arith.constant 0 : index
    %69 = vector.load %arg6[%c0_38, %c0_39, %c0_40] : memref<9x4x4xf32, #tpu.memory_space<vmem>>, vector<1x4x4xf32>
    %70 = vector.shape_cast %69 : vector<1x4x4xf32> to vector<4x4xf32>
    %cst_41 = arith.constant dense<0.000000e+00> : vector<4x256xf32>
    %71 = tpu.matmul %70, %68, %cst_41 {dimension_numbers = #tpu.dot_dimension_numbers<[1], [0], [0], [1], [0, 0, 1, 1], [], []>} : vector<4x4xf32>, vector<4x256xf32>, vector<4x256xf32> -> vector<4x256xf32>
    %72 = arith.addf %63, %71 : vector<4x256xf32>
    %c0_42 = arith.constant 0 : index
    %c112 = arith.constant 112 : index
    %73 = vector.load %arg12[%c0_42, %c112] : memref<4x512xf32, #tpu.memory_space<vmem>>, vector<4x256xf32>
    %c1 = arith.constant 1 : index
    %c0_43 = arith.constant 0 : index
    %c0_44 = arith.constant 0 : index
    %74 = vector.load %arg10[%c1, %c0_43, %c0_44] : memref<9x1x256xf32, #tpu.memory_space<vmem>>, vector<1x1x256xf32>
    %75 = vector.shape_cast %74 : vector<1x1x256xf32> to vector<1x256xf32>
    %76 = vector.broadcast %75 : vector<1x256xf32> to vector<4x256xf32>
    %77 = arith.mulf %73, %76 : vector<4x256xf32>
    %c1_45 = arith.constant 1 : index
    %c0_46 = arith.constant 0 : index
    %c0_47 = arith.constant 0 : index
    %78 = vector.load %arg6[%c1_45, %c0_46, %c0_47] : memref<9x4x4xf32, #tpu.memory_space<vmem>>, vector<1x4x4xf32>
    %79 = vector.shape_cast %78 : vector<1x4x4xf32> to vector<4x4xf32>
    %cst_48 = arith.constant dense<0.000000e+00> : vector<4x256xf32>
    %80 = tpu.matmul %79, %77, %cst_48 {dimension_numbers = #tpu.dot_dimension_numbers<[1], [0], [0], [1], [0, 0, 1, 1], [], []>} : vector<4x4xf32>, vector<4x256xf32>, vector<4x256xf32> -> vector<4x256xf32>
    %81 = arith.addf %72, %80 : vector<4x256xf32>
    %c0_49 = arith.constant 0 : index
    %c113 = arith.constant 113 : index
    %82 = vector.load %arg12[%c0_49, %c113] : memref<4x512xf32, #tpu.memory_space<vmem>>, vector<4x256xf32>
    %c2 = arith.constant 2 : index
    %c0_50 = arith.constant 0 : index
    %c0_51 = arith.constant 0 : index
    %83 = vector.load %arg10[%c2, %c0_50, %c0_51] : memref<9x1x256xf32, #tpu.memory_space<vmem>>, vector<1x1x256xf32>
    %84 = vector.shape_cast %83 : vector<1x1x256xf32> to vector<1x256xf32>
    %85 = vector.broadcast %84 : vector<1x256xf32> to vector<4x256xf32>
    %86 = arith.mulf %82, %85 : vector<4x256xf32>
    %c2_52 = arith.constant 2 : index
    %c0_53 = arith.constant 0 : index
    %c0_54 = arith.constant 0 : index
    %87 = vector.load %arg6[%c2_52, %c0_53, %c0_54] : memref<9x4x4xf32, #tpu.memory_space<vmem>>, vector<1x4x4xf32>
    %88 = vector.shape_cast %87 : vector<1x4x4xf32> to vector<4x4xf32>
    %cst_55 = arith.constant dense<0.000000e+00> : vector<4x256xf32>
    %89 = tpu.matmul %88, %86, %cst_55 {dimension_numbers = #tpu.dot_dimension_numbers<[1], [0], [0], [1], [0, 0, 1, 1], [], []>} : vector<4x4xf32>, vector<4x256xf32>, vector<4x256xf32> -> vector<4x256xf32>
    %90 = arith.addf %81, %89 : vector<4x256xf32>
    %c0_56 = arith.constant 0 : index
    %c127 = arith.constant 127 : index
    %91 = vector.load %arg12[%c0_56, %c127] : memref<4x512xf32, #tpu.memory_space<vmem>>, vector<4x256xf32>
    %c3 = arith.constant 3 : index
    %c0_57 = arith.constant 0 : index
    %c0_58 = arith.constant 0 : index
    %92 = vector.load %arg10[%c3, %c0_57, %c0_58] : memref<9x1x256xf32, #tpu.memory_space<vmem>>, vector<1x1x256xf32>
    %93 = vector.shape_cast %92 : vector<1x1x256xf32> to vector<1x256xf32>
    %94 = vector.broadcast %93 : vector<1x256xf32> to vector<4x256xf32>
    %95 = arith.mulf %91, %94 : vector<4x256xf32>
    %c3_59 = arith.constant 3 : index
    %c0_60 = arith.constant 0 : index
    %c0_61 = arith.constant 0 : index
    %96 = vector.load %arg6[%c3_59, %c0_60, %c0_61] : memref<9x4x4xf32, #tpu.memory_space<vmem>>, vector<1x4x4xf32>
    %97 = vector.shape_cast %96 : vector<1x4x4xf32> to vector<4x4xf32>
    %cst_62 = arith.constant dense<0.000000e+00> : vector<4x256xf32>
    %98 = tpu.matmul %97, %95, %cst_62 {dimension_numbers = #tpu.dot_dimension_numbers<[1], [0], [0], [1], [0, 0, 1, 1], [], []>} : vector<4x4xf32>, vector<4x256xf32>, vector<4x256xf32> -> vector<4x256xf32>
    %99 = arith.addf %90, %98 : vector<4x256xf32>
    %c0_63 = arith.constant 0 : index
    %c128_64 = arith.constant 128 : index
    %100 = vector.load %arg12[%c0_63, %c128_64] : memref<4x512xf32, #tpu.memory_space<vmem>>, vector<4x256xf32>
    %c4 = arith.constant 4 : index
    %c0_65 = arith.constant 0 : index
    %c0_66 = arith.constant 0 : index
    %101 = vector.load %arg10[%c4, %c0_65, %c0_66] : memref<9x1x256xf32, #tpu.memory_space<vmem>>, vector<1x1x256xf32>
    %102 = vector.shape_cast %101 : vector<1x1x256xf32> to vector<1x256xf32>
    %103 = vector.broadcast %102 : vector<1x256xf32> to vector<4x256xf32>
    %104 = arith.mulf %100, %103 : vector<4x256xf32>
    %c4_67 = arith.constant 4 : index
    %c0_68 = arith.constant 0 : index
    %c0_69 = arith.constant 0 : index
    %105 = vector.load %arg6[%c4_67, %c0_68, %c0_69] : memref<9x4x4xf32, #tpu.memory_space<vmem>>, vector<1x4x4xf32>
    %106 = vector.shape_cast %105 : vector<1x4x4xf32> to vector<4x4xf32>
    %cst_70 = arith.constant dense<0.000000e+00> : vector<4x256xf32>
    %107 = tpu.matmul %106, %104, %cst_70 {dimension_numbers = #tpu.dot_dimension_numbers<[1], [0], [0], [1], [0, 0, 1, 1], [], []>} : vector<4x4xf32>, vector<4x256xf32>, vector<4x256xf32> -> vector<4x256xf32>
    %108 = arith.addf %99, %107 : vector<4x256xf32>
    %c0_71 = arith.constant 0 : index
    %c129 = arith.constant 129 : index
    %109 = vector.load %arg12[%c0_71, %c129] : memref<4x512xf32, #tpu.memory_space<vmem>>, vector<4x256xf32>
    %c5 = arith.constant 5 : index
    %c0_72 = arith.constant 0 : index
    %c0_73 = arith.constant 0 : index
    %110 = vector.load %arg10[%c5, %c0_72, %c0_73] : memref<9x1x256xf32, #tpu.memory_space<vmem>>, vector<1x1x256xf32>
    %111 = vector.shape_cast %110 : vector<1x1x256xf32> to vector<1x256xf32>
    %112 = vector.broadcast %111 : vector<1x256xf32> to vector<4x256xf32>
    %113 = arith.mulf %109, %112 : vector<4x256xf32>
    %c5_74 = arith.constant 5 : index
    %c0_75 = arith.constant 0 : index
    %c0_76 = arith.constant 0 : index
    %114 = vector.load %arg6[%c5_74, %c0_75, %c0_76] : memref<9x4x4xf32, #tpu.memory_space<vmem>>, vector<1x4x4xf32>
    %115 = vector.shape_cast %114 : vector<1x4x4xf32> to vector<4x4xf32>
    %cst_77 = arith.constant dense<0.000000e+00> : vector<4x256xf32>
    %116 = tpu.matmul %115, %113, %cst_77 {dimension_numbers = #tpu.dot_dimension_numbers<[1], [0], [0], [1], [0, 0, 1, 1], [], []>} : vector<4x4xf32>, vector<4x256xf32>, vector<4x256xf32> -> vector<4x256xf32>
    %117 = arith.addf %108, %116 : vector<4x256xf32>
    %c0_78 = arith.constant 0 : index
    %c143 = arith.constant 143 : index
    %118 = vector.load %arg12[%c0_78, %c143] : memref<4x512xf32, #tpu.memory_space<vmem>>, vector<4x256xf32>
    %c6 = arith.constant 6 : index
    %c0_79 = arith.constant 0 : index
    %c0_80 = arith.constant 0 : index
    %119 = vector.load %arg10[%c6, %c0_79, %c0_80] : memref<9x1x256xf32, #tpu.memory_space<vmem>>, vector<1x1x256xf32>
    %120 = vector.shape_cast %119 : vector<1x1x256xf32> to vector<1x256xf32>
    %121 = vector.broadcast %120 : vector<1x256xf32> to vector<4x256xf32>
    %122 = arith.mulf %118, %121 : vector<4x256xf32>
    %c6_81 = arith.constant 6 : index
    %c0_82 = arith.constant 0 : index
    %c0_83 = arith.constant 0 : index
    %123 = vector.load %arg6[%c6_81, %c0_82, %c0_83] : memref<9x4x4xf32, #tpu.memory_space<vmem>>, vector<1x4x4xf32>
    %124 = vector.shape_cast %123 : vector<1x4x4xf32> to vector<4x4xf32>
    %cst_84 = arith.constant dense<0.000000e+00> : vector<4x256xf32>
    %125 = tpu.matmul %124, %122, %cst_84 {dimension_numbers = #tpu.dot_dimension_numbers<[1], [0], [0], [1], [0, 0, 1, 1], [], []>} : vector<4x4xf32>, vector<4x256xf32>, vector<4x256xf32> -> vector<4x256xf32>
    %126 = arith.addf %117, %125 : vector<4x256xf32>
    %c0_85 = arith.constant 0 : index
    %c144 = arith.constant 144 : index
    %127 = vector.load %arg12[%c0_85, %c144] : memref<4x512xf32, #tpu.memory_space<vmem>>, vector<4x256xf32>
    %c7 = arith.constant 7 : index
    %c0_86 = arith.constant 0 : index
    %c0_87 = arith.constant 0 : index
    %128 = vector.load %arg10[%c7, %c0_86, %c0_87] : memref<9x1x256xf32, #tpu.memory_space<vmem>>, vector<1x1x256xf32>
    %129 = vector.shape_cast %128 : vector<1x1x256xf32> to vector<1x256xf32>
    %130 = vector.broadcast %129 : vector<1x256xf32> to vector<4x256xf32>
    %131 = arith.mulf %127, %130 : vector<4x256xf32>
    %c7_88 = arith.constant 7 : index
    %c0_89 = arith.constant 0 : index
    %c0_90 = arith.constant 0 : index
    %132 = vector.load %arg6[%c7_88, %c0_89, %c0_90] : memref<9x4x4xf32, #tpu.memory_space<vmem>>, vector<1x4x4xf32>
    %133 = vector.shape_cast %132 : vector<1x4x4xf32> to vector<4x4xf32>
    %cst_91 = arith.constant dense<0.000000e+00> : vector<4x256xf32>
    %134 = tpu.matmul %133, %131, %cst_91 {dimension_numbers = #tpu.dot_dimension_numbers<[1], [0], [0], [1], [0, 0, 1, 1], [], []>} : vector<4x4xf32>, vector<4x256xf32>, vector<4x256xf32> -> vector<4x256xf32>
    %135 = arith.addf %126, %134 : vector<4x256xf32>
    %c0_92 = arith.constant 0 : index
    %c145 = arith.constant 145 : index
    %136 = vector.load %arg12[%c0_92, %c145] : memref<4x512xf32, #tpu.memory_space<vmem>>, vector<4x256xf32>
    %c8 = arith.constant 8 : index
    %c0_93 = arith.constant 0 : index
    %c0_94 = arith.constant 0 : index
    %137 = vector.load %arg10[%c8, %c0_93, %c0_94] : memref<9x1x256xf32, #tpu.memory_space<vmem>>, vector<1x1x256xf32>
    %138 = vector.shape_cast %137 : vector<1x1x256xf32> to vector<1x256xf32>
    %139 = vector.broadcast %138 : vector<1x256xf32> to vector<4x256xf32>
    %140 = arith.mulf %136, %139 : vector<4x256xf32>
    %c8_95 = arith.constant 8 : index
    %c0_96 = arith.constant 0 : index
    %c0_97 = arith.constant 0 : index
    %141 = vector.load %arg6[%c8_95, %c0_96, %c0_97] : memref<9x4x4xf32, #tpu.memory_space<vmem>>, vector<1x4x4xf32>
    %142 = vector.shape_cast %141 : vector<1x4x4xf32> to vector<4x4xf32>
    %cst_98 = arith.constant dense<0.000000e+00> : vector<4x256xf32>
    %143 = tpu.matmul %142, %140, %cst_98 {dimension_numbers = #tpu.dot_dimension_numbers<[1], [0], [0], [1], [0, 0, 1, 1], [], []>} : vector<4x4xf32>, vector<4x256xf32>, vector<4x256xf32> -> vector<4x256xf32>
    %144 = arith.addf %135, %143 : vector<4x256xf32>
    %c0_99 = arith.constant 0 : index
    %c0_100 = arith.constant 0 : index
    %145 = vector.load %arg7[%c0_99, %c0_100] : memref<4x1xf32, #tpu.memory_space<vmem>>, vector<4x1xf32>
    %146 = vector.broadcast %145 : vector<4x1xf32> to vector<4x256xf32>
    %147 = arith.addf %144, %146 : vector<4x256xf32>
    %c0_101 = arith.constant 0 : index
    %c0_102 = arith.constant 0 : index
    %c0_103 = arith.constant 0 : index
    %148 = vector.load %arg4[%c0_101, %c0_102, %c0_103] : memref<1x4x1xf32, #tpu.memory_space<vmem>>, vector<1x4x1xf32>
    %149 = vector.shape_cast %148 : vector<1x4x1xf32> to vector<4x1xf32>
    %c0_104 = arith.constant 0 : index
    %c0_105 = arith.constant 0 : index
    %c0_106 = arith.constant 0 : index
    %150 = vector.load %arg5[%c0_104, %c0_105, %c0_106] : memref<1x4x1xf32, #tpu.memory_space<vmem>>, vector<1x4x1xf32>
    %151 = vector.shape_cast %150 : vector<1x4x1xf32> to vector<4x1xf32>
    %cst_107 = arith.constant dense<0.000000e+00> : vector<4xf32>
    %152 = vector.multi_reduction <add>, %147, %cst_107 [1] : vector<4x256xf32> to vector<4xf32>
    %153 = vector.shape_cast %152 : vector<4xf32> to vector<4x1xf32>
    %cst_108 = arith.constant 2.560000e+02 : f32
    %154 = vector.broadcast %cst_108 : f32 to vector<4x1xf32>
    %155 = arith.divf %153, %154 : vector<4x1xf32>
    %cst_109 = arith.constant dense<0.000000e+00> : vector<1xf32>
    %156 = vector.multi_reduction <add>, %155, %cst_109 [0] : vector<4x1xf32> to vector<1xf32>
    %157 = vector.shape_cast %156 : vector<1xf32> to vector<1x1xf32>
    %cst_110 = arith.constant 4.000000e+00 : f32
    %158 = vector.broadcast %cst_110 : f32 to vector<1x1xf32>
    %159 = arith.divf %157, %158 : vector<1x1xf32>
    %cst_111 = arith.constant dense<0.000000e+00> : vector<4x16xf32>
    %160 = tpu.matmul %147, %2, %cst_111 {dimension_numbers = #tpu.dot_dimension_numbers<[1], [0], [0], [1], [0, 0, 1, 1], [], []>} : vector<4x256xf32>, vector<256x16xf32>, vector<4x16xf32> -> vector<4x16xf32>
    %cst_112 = arith.constant 6.250000e-02 : f32
    %161 = vector.broadcast %cst_112 : f32 to vector<4x16xf32>
    %162 = arith.mulf %160, %161 : vector<4x16xf32>
    %cst_113 = arith.constant dense<0.000000e+00> : vector<4x256xf32>
    %163 = tpu.matmul %162, %3, %cst_113 {dimension_numbers = #tpu.dot_dimension_numbers<[1], [0], [0], [1], [0, 0, 1, 1], [], []>} : vector<4x16xf32>, vector<16x256xf32>, vector<4x256xf32> -> vector<4x256xf32>
    %164 = arith.subf %147, %163 : vector<4x256xf32>
    %165 = arith.mulf %164, %164 : vector<4x256xf32>
    %cst_114 = arith.constant dense<0.000000e+00> : vector<4x16xf32>
    %166 = tpu.matmul %165, %2, %cst_114 {dimension_numbers = #tpu.dot_dimension_numbers<[1], [0], [0], [1], [0, 0, 1, 1], [], []>} : vector<4x256xf32>, vector<256x16xf32>, vector<4x16xf32> -> vector<4x16xf32>
    %cst_115 = arith.constant 0.0666666701 : f32
    %167 = vector.broadcast %cst_115 : f32 to vector<4x16xf32>
    %168 = arith.mulf %166, %167 : vector<4x16xf32>
    %169 = math.sqrt %168 : vector<4x16xf32>
    %cst_116 = arith.constant dense<0.000000e+00> : vector<4xf32>
    %170 = vector.multi_reduction <add>, %169, %cst_116 [1] : vector<4x16xf32> to vector<4xf32>
    %171 = vector.shape_cast %170 : vector<4xf32> to vector<4x1xf32>
    %cst_117 = arith.constant 1.600000e+01 : f32
    %172 = vector.broadcast %cst_117 : f32 to vector<4x1xf32>
    %173 = arith.divf %171, %172 : vector<4x1xf32>
    %174 = vector.broadcast %173 : vector<4x1xf32> to vector<4x16xf32>
    %175 = arith.subf %169, %174 : vector<4x16xf32>
    %176 = arith.mulf %175, %175 : vector<4x16xf32>
    %cst_118 = arith.constant dense<0.000000e+00> : vector<4xf32>
    %177 = vector.multi_reduction <add>, %176, %cst_118 [1] : vector<4x16xf32> to vector<4xf32>
    %178 = vector.shape_cast %177 : vector<4xf32> to vector<4x1xf32>
    %cst_119 = arith.constant 0.0666666701 : f32
    %179 = vector.broadcast %cst_119 : f32 to vector<4x1xf32>
    %180 = arith.mulf %178, %179 : vector<4x1xf32>
    %181 = math.sqrt %180 : vector<4x1xf32>
    %cst_120 = arith.constant dense<0.000000e+00> : vector<1xf32>
    %182 = vector.multi_reduction <add>, %181, %cst_120 [0] : vector<4x1xf32> to vector<1xf32>
    %183 = vector.shape_cast %182 : vector<1xf32> to vector<1x1xf32>
    %cst_121 = arith.constant 4.000000e+00 : f32
    %184 = vector.broadcast %cst_121 : f32 to vector<1x1xf32>
    %185 = arith.divf %183, %184 : vector<1x1xf32>
    %186 = vector.broadcast %185 : vector<1x1xf32> to vector<4x1xf32>
    %187 = arith.subf %181, %186 : vector<4x1xf32>
    %188 = arith.mulf %187, %187 : vector<4x1xf32>
    %cst_122 = arith.constant dense<0.000000e+00> : vector<1xf32>
    %189 = vector.multi_reduction <add>, %188, %cst_122 [0] : vector<4x1xf32> to vector<1xf32>
    %190 = vector.shape_cast %189 : vector<1xf32> to vector<1x1xf32>
    %cst_123 = arith.constant 0.333333343 : f32
    %191 = vector.broadcast %cst_123 : f32 to vector<1x1xf32>
    %192 = arith.mulf %190, %191 : vector<1x1xf32>
    %cst_124 = arith.constant 9.99999993E-9 : f32
    %193 = vector.broadcast %cst_124 : f32 to vector<1x1xf32>
    %194 = arith.addf %192, %193 : vector<1x1xf32>
    %195 = math.rsqrt %194 : vector<1x1xf32>
    %196 = vector.broadcast %159 : vector<1x1xf32> to vector<4x256xf32>
    %197 = arith.subf %147, %196 : vector<4x256xf32>
    %198 = vector.broadcast %195 : vector<1x1xf32> to vector<4x256xf32>
    %199 = arith.mulf %197, %198 : vector<4x256xf32>
    %200 = vector.broadcast %149 : vector<4x1xf32> to vector<4x256xf32>
    %201 = arith.mulf %199, %200 : vector<4x256xf32>
    %202 = vector.broadcast %151 : vector<4x1xf32> to vector<4x256xf32>
    %203 = arith.addf %201, %202 : vector<4x256xf32>
    %c0_125 = arith.constant 0 : index
    %c0_126 = arith.constant 0 : index
    %c0_127 = arith.constant 0 : index
    %204 = vector.load %arg11[%c0_125, %c0_126, %c0_127] : memref<1x4x256xf32, #tpu.memory_space<vmem>>, vector<1x4x256xf32>
    %205 = vector.shape_cast %204 : vector<1x4x256xf32> to vector<4x256xf32>
    %206 = vector.shape_cast %203 : vector<4x256xf32> to vector<1x4x256xf32>
    tpu.vector_store %arg11[%c0_125, %c0_126, %c0_127], %206 {strides = array<i32>} : memref<1x4x256xf32, #tpu.memory_space<vmem>>, vector<1x4x256xf32>,
    return
  }
  func.func @transform_0(%arg0: i32) -> (i32, i32, i32) {
    %c0_i32 = arith.constant 0 : i32
    %c0_i32_0 = arith.constant 0 : i32
    %c0_i32_1 = arith.constant 0 : i32
    return %arg0, %c0_i32, %c0_i32_0 : i32, i32, i32
  }
  func.func @transform_1(%arg0: i32) -> (i32, i32, i32) {
    %c0_i32 = arith.constant 0 : i32
    %c0_i32_0 = arith.constant 0 : i32
    %c0_i32_1 = arith.constant 0 : i32
    return %arg0, %c0_i32, %c0_i32_0 : i32, i32, i32
  }
  func.func @transform_2(%arg0: i32) -> (i32, i32, i32) {
    %c0_i32 = arith.constant 0 : i32
    %c0_i32_0 = arith.constant 0 : i32
    %c0_i32_1 = arith.constant 0 : i32
    return %arg0, %c0_i32, %c0_i32_0 : i32, i32, i32
  }
  func.func @transform_3(%arg0: i32) -> (i32, i32, i32) {
    %c0_i32 = arith.constant 0 : i32
    %c0_i32_0 = arith.constant 0 : i32
    %c0_i32_1 = arith.constant 0 : i32
    return %arg0, %c0_i32, %c0_i32_0 : i32, i32, i32
  }
  func.func @transform_4(%arg0: i32) -> (i32, i32, i32) {
    %c0_i32 = arith.constant 0 : i32
    %c0_i32_0 = arith.constant 0 : i32
    %c0_i32_1 = arith.constant 0 : i32
    return %arg0, %c0_i32, %c0_i32_0 : i32, i32, i32
  }
  func.func @transform_5(%arg0: i32) -> (i32, i32, i32) {
    %c0_i32 = arith.constant 0 : i32
    %c0_i32_0 = arith.constant 0 : i32
    %c0_i32_1 = arith.constant 0 : i32
    %c0_i32_2 = arith.constant 0 : i32
    return %c0_i32, %c0_i32_0, %c0_i32_1 : i32, i32, i32
  }
  func.func @transform_6(%arg0: i32) -> (i32, i32) {
    %c0_i32 = arith.constant 0 : i32
    %c0_i32_0 = arith.constant 0 : i32
    %c0_i32_1 = arith.constant 0 : i32
    return %c0_i32, %c0_i32_0 : i32, i32
  }
  func.func @transform_7(%arg0: i32) -> (i32, i32) {
    %c0_i32 = arith.constant 0 : i32
    %c0_i32_0 = arith.constant 0 : i32
    %c0_i32_1 = arith.constant 0 : i32
    return %c0_i32, %c0_i32_0 : i32, i32
  }
  func.func @transform_8(%arg0: i32) -> (i32, i32) {
    %c0_i32 = arith.constant 0 : i32
    %c0_i32_0 = arith.constant 0 : i32
    %c0_i32_1 = arith.constant 0 : i32
    return %c0_i32, %c0_i32_0 : i32, i32
  }
  func.func @transform_9(%arg0: i32) -> (i32, i32, i32) {
    %c0_i32 = arith.constant 0 : i32
    %c0_i32_0 = arith.constant 0 : i32
    %c0_i32_1 = arith.constant 0 : i32
    %c0_i32_2 = arith.constant 0 : i32
    return %c0_i32, %c0_i32_0, %c0_i32_1 : i32, i32, i32
  }
  func.func @transform_10(%arg0: i32) -> (i32, i32, i32) {
    %c0_i32 = arith.constant 0 : i32
    %c0_i32_0 = arith.constant 0 : i32
    %c0_i32_1 = arith.constant 0 : i32
    return %arg0, %c0_i32, %c0_i32_0 : i32, i32, i32
  }
}

</mosaic_0001>

<llo_original>
// kernel: sequential_with_adain.1
$region0: #{sequential_with_adain.1}
  #allocation0 [shape = 'u32[]', space=smem, size = 0x4, offset = 0x4, fixed_abs, tag = 'smem constant byte address 0x4 - core index']
  #allocation1 [shape = 'u32[144,128]{1,0:T(1,128)}', space=vmem, size = 0x12000, scoped, tag = 'internal scratch']
  #allocation2 [shape = 'f32[4,512]{1,0:T(4,128)}', space=vmem, size = 0x2000, scoped, tag = 'scratch operand']
  %s0 = inlined_call_operand.hbm [shape: f32[2,4,256], index: 0, kind: input, shape index: {}]
  %s1 = inlined_call_operand.hbm [shape: f32[2,4,1], index: 1, kind: input, shape index: {}]
  %s2 = inlined_call_operand.hbm [shape: f32[2,4,1], index: 2, kind: input, shape index: {}]
  %s3 = inlined_call_operand.hbm [shape: f32[2,4,1], index: 3, kind: input, shape index: {}]
  %s4 = inlined_call_operand.hbm [shape: f32[2,4,1], index: 4, kind: input, shape index: {}]
  %s5 = inlined_call_operand.hbm [shape: f32[9,4,4], index: 5, kind: input, shape index: {}]
  %s6 = inlined_call_operand.hbm [shape: f32[4,1], index: 6, kind: input, shape index: {}]
  %s7 = inlined_call_operand.hbm [shape: f32[256,16], index: 7, kind: input, shape index: {}]
  %s8 = inlined_call_operand.hbm [shape: f32[16,256], index: 8, kind: input, shape index: {}]
  %s9 = inlined_call_operand.hbm [shape: f32[9,1,256], index: 9, kind: input, shape index: {}]
  %s10 = inlined_call_operand.hbm [shape: f32[2,4,256], index: 10, kind: output, shape index: {}]
  %s11 = sld [smem:[#allocation0]]
  $region113: #{sequential_with_adain.1} parent=0
    _
  %s13 = ssub.s32 1, %s11
  %s14 = scalar_select 0, %s13, %s11
  $region1: #{sequential_with_adain.1} parent=0
    #allocation3 [shape = 'u8[8192]{0}', space=vmem, size = 0x2000, scoped, tag = 'input window, operand 0']
    #allocation4 [shape = 's32[2]{0}', space=sflag, size = 0x8, scoped, tag = 'scoped memory for sequential_with_adain.1']
    #allocation5 [shape = 's32[2]{0}', space=sflag, size = 0x8, scoped, tag = 'scoped memory for sequential_with_adain.1']
    #allocation6 [shape = 'u8[4096]{0}', space=vmem, size = 0x1000, scoped, tag = 'input window, operand 1']
    #allocation7 [shape = 's32[2]{0}', space=sflag, size = 0x8, scoped, tag = 'scoped memory for sequential_with_adain.1']
    #allocation8 [shape = 'u8[4096]{0}', space=vmem, size = 0x1000, scoped, tag = 'input window, operand 2']
    #allocation9 [shape = 'u8[4096]{0}', space=vmem, size = 0x1000, scoped, tag = 'input window, operand 3']
    #allocation10 [shape = 's32[2]{0}', space=sflag, size = 0x8, scoped, tag = 'scoped memory for sequential_with_adain.1']
    #allocation11 [shape = 'u8[4096]{0}', space=vmem, size = 0x1000, scoped, tag = 'input window, operand 4']
    #allocation12 [shape = 'u8[18432]{0}', space=vmem, size = 0x4800, scoped, tag = 'input window, operand 5, single buffered']
    #allocation13 [shape = 's32[1]{0}', space=sflag, size = 0x4, scoped, tag = 'scoped memory for sequential_with_adain.1']
    #allocation14 [shape = 'u8[2048]{0}', space=vmem, size = 0x800, scoped, tag = 'input window, operand 6, single buffered']
    #allocation15 [shape = 'u8[131072]{0}', space=vmem, size = 0x20000, scoped, tag = 'input window, operand 7, single buffered']
    #allocation16 [shape = 's32[1]{0}', space=sflag, size = 0x4, scoped, tag = 'scoped memory for sequential_with_adain.1']
    #allocation17 [shape = 'u8[16384]{0}', space=vmem, size = 0x4000, scoped, tag = 'input window, operand 8, single buffered']
    #allocation18 [shape = 'u8[9216]{0}', space=vmem, size = 0x2400, scoped, tag = 'input window, operand 9, single buffered']
    #allocation19 [shape = 's32[1]{0}', space=sflag, size = 0x4, scoped, tag = 'scoped memory for sequential_with_adain.1']
    #allocation20 [shape = 'u8[8192]{0}', space=vmem, size = 0x2000, scoped, tag = 'output window, operand 0']
    %15 = vsyncpa [#allocation4], 0
    %s16 = scalar_lea.sflag [#allocation4], 1
    %17 = vsyncpa %s16, 0
    %18 = vsyncpa [#allocation7], 0
    %s19 = scalar_lea.sflag [#allocation7], 1
    %20 = vsyncpa %s19, 0
    %21 = vsyncpa [#allocation10], 0
    %s22 = scalar_lea.sflag [#allocation10], 1
    %23 = vsyncpa %s22, 0
    %24 = vsyncpa [#allocation13], 0
    %25 = vsyncpa [#allocation16], 0
    %26 = vsyncpa [#allocation19], 0
    %27 = vsyncpa [#allocation5], 0
    %s28 = scalar_lea.sflag [#allocation5], 1
    %29 = vsyncpa %s28, 0
    loop: start=0, step=1, limit=4
    $region2: #{sequential_with_adain.1} parent=1 // loop_pre_header
      _
    $region3: #{sequential_with_adain.1} parent=1 // loop_header
      %s31 = sphi 0, %s35
      %p32 = scmp.ge.s32.totalorder %s31, 4
      %s41 = sphi 0, %s43
      %s44 = sphi 0, %s41
      %s45 = sphi 0, %s44
      %s61 = sphi 0, %s45
      %s67 = sphi 0, %s69
      %s70 = sphi 0, %s67
      %s71 = sphi 0, %s70
      %s87 = sphi 0, %s71
      %s93 = sphi 0, %s95
      %s96 = sphi 0, %s93
      %s97 = sphi 0, %s96
      %s113 = sphi 0, %s97
      %s119 = sphi 0, %s121
      %s122 = sphi 0, %s119
      %s123 = sphi 0, %s122
      %s139 = sphi 0, %s123
      %s145 = sphi 0, %s147
      %s148 = sphi 0, %s145
      %s149 = sphi 0, %s148
      %s165 = sphi 0, %s149
      %s169 = sphi 0, %s169
      %s171 = sphi 0, %s169
      %s172 = sphi 0, %s171
      %s186 = sphi 0, %s172
      %s190 = sphi 0, %s190
      %s192 = sphi 0, %s190
      %s193 = sphi 0, %s192
      %s207 = sphi 0, %s193
      %s211 = sphi 0, %s211
      %s213 = sphi 0, %s211
      %s214 = sphi 0, %s213
      %s228 = sphi 0, %s214
      %s232 = sphi 0, %s232
      %s234 = sphi 0, %s232
      %s235 = sphi 0, %s234
      %s249 = sphi 0, %s235
      %s253 = sphi 0, %s253
      %s255 = sphi 0, %s253
      %s256 = sphi 0, %s255
      %s270 = sphi 0, %s256
      %s276 = sphi 0, %s278
      %s279 = sphi 0, %s276
      %s280 = sphi 0, %s279
      %s296 = sphi 0, %s280
    $region4: #{sequential_with_adain.1} parent=1 // loop_header_branch
      %34 = sbr.rel (%p32) target = $region8
    $region5: #{sequential_with_adain.1} parent=1 // loop_body
      %s36 = ssub.s32 %s31, 1
      %s37 = ssub.s32 %s31, 2
      %s38 = sadd.s32 %s31, 1
      %s39 = ssub.s32 %s31, %s38
      %p40 = scmp.eq.s32.totalorder %s39, 0
      %s42 = sadd.s32 %s41, 1
      %s43 = scalar_select %p40, %s41, %s42
      %p46 = pneg %p40
      %p47 = scmp.eq.s32.totalorder %s31, 1
      %p48 = por %p46, %p47
      %p49 = scmp.ne.s32.totalorder %s41, %s44
      %p50 = scmp.eq.s32.totalorder %s31, 0
      %p51 = por %p49, %p50
      %p52 = scmp.ne.s32.totalorder %s41, %s44
      %p53 = scmp.eq.s32.totalorder %s36, 1
      %p54 = por %p52, %p53
      %p55 = scmp.ne.s32.totalorder %s44, %s45
      %p56 = scmp.eq.s32.totalorder %s36, 0
      %p57 = por %p55, %p56
      %p58 = scmp.ne.s32.totalorder %s44, %s45
      %p59 = scmp.eq.s32.totalorder %s37, 1
      %p60 = por %p58, %p59
      %p62 = scmp.ne.s32.totalorder %s45, %s61
      %p63 = scmp.eq.s32.totalorder %s37, 0
      %p64 = por %p62, %p63
      %s65 = ssub.s32 %s31, %s38
      %p66 = scmp.eq.s32.totalorder %s65, 0
      %s68 = sadd.s32 %s67, 1
      %s69 = scalar_select %p66, %s67, %s68
      %p72 = pneg %p66
      %p73 = scmp.eq.s32.totalorder %s31, 1
      %p74 = por %p72, %p73
      %p75 = scmp.ne.s32.totalorder %s67, %s70
      %p76 = scmp.eq.s32.totalorder %s31, 0
      %p77 = por %p75, %p76
      %p78 = scmp.ne.s32.totalorder %s67, %s70
      %p79 = scmp.eq.s32.totalorder %s36, 1
      %p80 = por %p78, %p79
      %p81 = scmp.ne.s32.totalorder %s70, %s71
      %p82 = scmp.eq.s32.totalorder %s36, 0
      %p83 = por %p81, %p82
      %p84 = scmp.ne.s32.totalorder %s70, %s71
      %p85 = scmp.eq.s32.totalorder %s37, 1
      %p86 = por %p84, %p85
      %p88 = scmp.ne.s32.totalorder %s71, %s87
      %p89 = scmp.eq.s32.totalorder %s37, 0
      %p90 = por %p88, %p89
      %s91 = ssub.s32 %s31, %s38
      %p92 = scmp.eq.s32.totalorder %s91, 0
      %s94 = sadd.s32 %s93, 1
      %s95 = scalar_select %p92, %s93, %s94
      %p98 = pneg %p92
      %p99 = scmp.eq.s32.totalorder %s31, 1
      %p100 = por %p98, %p99
      %p101 = scmp.ne.s32.totalorder %s93, %s96
      %p102 = scmp.eq.s32.totalorder %s31, 0
      %p103 = por %p101, %p102
      %p104 = scmp.ne.s32.totalorder %s93, %s96
      %p105 = scmp.eq.s32.totalorder %s36, 1
      %p106 = por %p104, %p105
      %p107 = scmp.ne.s32.totalorder %s96, %s97
      %p108 = scmp.eq.s32.totalorder %s36, 0
      %p109 = por %p107, %p108
      %p110 = scmp.ne.s32.totalorder %s96, %s97
      %p111 = scmp.eq.s32.totalorder %s37, 1
      %p112 = por %p110, %p111
      %p114 = scmp.ne.s32.totalorder %s97, %s113
      %p115 = scmp.eq.s32.totalorder %s37, 0
      %p116 = por %p114, %p115
      %s117 = ssub.s32 %s31, %s38
      %p118 = scmp.eq.s32.totalorder %s117, 0
      %s120 = sadd.s32 %s119, 1
      %s121 = scalar_select %p118, %s119, %s120
      %p124 = pneg %p118
      %p125 = scmp.eq.s32.totalorder %s31, 1
      %p126 = por %p124, %p125
      %p127 = scmp.ne.s32.totalorder %s119, %s122
      %p128 = scmp.eq.s32.totalorder %s31, 0
      %p129 = por %p127, %p128
      %p130 = scmp.ne.s32.totalorder %s119, %s122
      %p131 = scmp.eq.s32.totalorder %s36, 1
      %p132 = por %p130, %p131
      %p133 = scmp.ne.s32.totalorder %s122, %s123
      %p134 = scmp.eq.s32.totalorder %s36, 0
      %p135 = por %p133, %p134
      %p136 = scmp.ne.s32.totalorder %s122, %s123
      %p137 = scmp.eq.s32.totalorder %s37, 1
      %p138 = por %p136, %p137
      %p140 = scmp.ne.s32.totalorder %s123, %s139
      %p141 = scmp.eq.s32.totalorder %s37, 0
      %p142 = por %p140, %p141
      %s143 = ssub.s32 %s31, %s38
      %p144 = scmp.eq.s32.totalorder %s143, 0
      %s146 = sadd.s32 %s145, 1
      %s147 = scalar_select %p144, %s145, %s146
      %p150 = pneg %p144
      %p151 = scmp.eq.s32.totalorder %s31, 1
      %p152 = por %p150, %p151
      %p153 = scmp.ne.s32.totalorder %s145, %s148
      %p154 = scmp.eq.s32.totalorder %s31, 0
      %p155 = por %p153, %p154
      %p156 = scmp.ne.s32.totalorder %s145, %s148
      %p157 = scmp.eq.s32.totalorder %s36, 1
      %p158 = por %p156, %p157
      %p159 = scmp.ne.s32.totalorder %s148, %s149
      %p160 = scmp.eq.s32.totalorder %s36, 0
      %p161 = por %p159, %p160
      %p162 = scmp.ne.s32.totalorder %s148, %s149
      %p163 = scmp.eq.s32.totalorder %s37, 1
      %p164 = por %p162, %p163
      %p166 = scmp.ne.s32.totalorder %s149, %s165
      %p167 = scmp.eq.s32.totalorder %s37, 0
      %p168 = por %p166, %p167
      %s170 = sadd.s32 %s169, 1
      %p173 = scmp.eq.s32.totalorder %s31, 1
      %p174 = scmp.ne.s32.totalorder %s169, %s171
      %p175 = scmp.eq.s32.totalorder %s31, 0
      %p176 = por %p174, %p175
      %p177 = scmp.ne.s32.totalorder %s169, %s171
      %p178 = scmp.eq.s32.totalorder %s36, 1
      %p179 = por %p177, %p178
      %p180 = scmp.ne.s32.totalorder %s171, %s172
      %p181 = scmp.eq.s32.totalorder %s36, 0
      %p182 = por %p180, %p181
      %p183 = scmp.ne.s32.totalorder %s171, %s172
      %p184 = scmp.eq.s32.totalorder %s37, 1
      %p185 = por %p183, %p184
      %p187 = scmp.ne.s32.totalorder %s172, %s186
      %p188 = scmp.eq.s32.totalorder %s37, 0
      %p189 = por %p187, %p188
      %s191 = sadd.s32 %s190, 1
      %p194 = scmp.eq.s32.totalorder %s31, 1
      %p195 = scmp.ne.s32.totalorder %s190, %s192
      %p196 = scmp.eq.s32.totalorder %s31, 0
      %p197 = por %p195, %p196
      %p198 = scmp.ne.s32.totalorder %s190, %s192
      %p199 = scmp.eq.s32.totalorder %s36, 1
      %p200 = por %p198, %p199
      %p201 = scmp.ne.s32.totalorder %s192, %s193
      %p202 = scmp.eq.s32.totalorder %s36, 0
      %p203 = por %p201, %p202
      %p204 = scmp.ne.s32.totalorder %s192, %s193
      %p205 = scmp.eq.s32.totalorder %s37, 1
      %p206 = por %p204, %p205
      %p208 = scmp.ne.s32.totalorder %s193, %s207
      %p209 = scmp.eq.s32.totalorder %s37, 0
      %p210 = por %p208, %p209
      %s212 = sadd.s32 %s211, 1
      %p215 = scmp.eq.s32.totalorder %s31, 1
      %p216 = scmp.ne.s32.totalorder %s211, %s213
      %p217 = scmp.eq.s32.totalorder %s31, 0
      %p218 = por %p216, %p217
      %p219 = scmp.ne.s32.totalorder %s211, %s213
      %p220 = scmp.eq.s32.totalorder %s36, 1
      %p221 = por %p219, %p220
      %p222 = scmp.ne.s32.totalorder %s213, %s214
      %p223 = scmp.eq.s32.totalorder %s36, 0
      %p224 = por %p222, %p223
      %p225 = scmp.ne.s32.totalorder %s213, %s214
      %p226 = scmp.eq.s32.totalorder %s37, 1
      %p227 = por %p225, %p226
      %p229 = scmp.ne.s32.totalorder %s214, %s228
      %p230 = scmp.eq.s32.totalorder %s37, 0
      %p231 = por %p229, %p230
      %s233 = sadd.s32 %s232, 1
      %p236 = scmp.eq.s32.totalorder %s31, 1
      %p237 = scmp.ne.s32.totalorder %s232, %s234
      %p238 = scmp.eq.s32.totalorder %s31, 0
      %p239 = por %p237, %p238
      %p240 = scmp.ne.s32.totalorder %s232, %s234
      %p241 = scmp.eq.s32.totalorder %s36, 1
      %p242 = por %p240, %p241
      %p243 = scmp.ne.s32.totalorder %s234, %s235
      %p244 = scmp.eq.s32.totalorder %s36, 0
      %p245 = por %p243, %p244
      %p246 = scmp.ne.s32.totalorder %s234, %s235
      %p247 = scmp.eq.s32.totalorder %s37, 1
      %p248 = por %p246, %p247
      %p250 = scmp.ne.s32.totalorder %s235, %s249
      %p251 = scmp.eq.s32.totalorder %s37, 0
      %p252 = por %p250, %p251
      %s254 = sadd.s32 %s253, 1
      %p257 = scmp.eq.s32.totalorder %s31, 1
      %p258 = scmp.ne.s32.totalorder %s253, %s255
      %p259 = scmp.eq.s32.totalorder %s31, 0
      %p260 = por %p258, %p259
      %p261 = scmp.ne.s32.totalorder %s253, %s255
      %p262 = scmp.eq.s32.totalorder %s36, 1
      %p263 = por %p261, %p262
      %p264 = scmp.ne.s32.totalorder %s255, %s256
      %p265 = scmp.eq.s32.totalorder %s36, 0
      %p266 = por %p264, %p265
      %p267 = scmp.ne.s32.totalorder %s255, %s256
      %p268 = scmp.eq.s32.totalorder %s37, 1
      %p269 = por %p267, %p268
      %p271 = scmp.ne.s32.totalorder %s256, %s270
      %p272 = scmp.eq.s32.totalorder %s37, 0
      %p273 = por %p271, %p272
      %s274 = ssub.s32 %s31, %s38
      %p275 = scmp.eq.s32.totalorder %s274, 0
      %s277 = sadd.s32 %s276, 1
      %s278 = scalar_select %p275, %s276, %s277
      %p281 = pneg %p275
      %p282 = scmp.eq.s32.totalorder %s31, 1
      %p283 = por %p281, %p282
      %p284 = scmp.ne.s32.totalorder %s276, %s279
      %p285 = scmp.eq.s32.totalorder %s31, 0
      %p286 = por %p284, %p285
      %p287 = scmp.ne.s32.totalorder %s276, %s279
      %p288 = scmp.eq.s32.totalorder %s36, 1
      %p289 = por %p287, %p288
      %p290 = scmp.ne.s32.totalorder %s279, %s280
      %p291 = scmp.eq.s32.totalorder %s36, 0
      %p292 = por %p290, %p291
      %p293 = scmp.ne.s32.totalorder %s279, %s280
      %p294 = scmp.eq.s32.totalorder %s37, 1
      %p295 = por %p293, %p294
      %p297 = scmp.ne.s32.totalorder %s280, %s296
      %p298 = scmp.eq.s32.totalorder %s37, 0
      %p299 = por %p297, %p298
      %p300 = scmp.le.s32.totalorder 1, %s31
      %p301 = scmp.lt.s32.totalorder %s31, 3
      %p302 = pnand %p300, %p301
      %p303 = pneg %p302
      // Predicated region
      $region9: #{sequential_with_adain.1} parent=5 // pred_check
        _
      $region10: #{sequential_with_adain.1} parent=5 // pred_check_branch
        %305 = sbr.rel (%p302) target = $region12
      $region11: #{sequential_with_adain.1} parent=5 // pred_region
        %s306 = ssub.s32 %s31, 1
        // Predicated region
        $region13: #{sequential_with_adain.1} parent=11 // pred_check
          %p307 = pneg %p182
        $region14: #{sequential_with_adain.1} parent=11 // pred_check_branch
          %309 = sbr.rel (%p307) target = $region16
        $region15: #{sequential_with_adain.1} parent=11 // pred_region
          %s311 = ssub.s32 576, 576
          %312 = vsyncadd [#allocation13], %s311
          %s313 = sshll.u32 [#allocation12], 4
          %s314 = int_to_ptr.vmem [resolvable:$true] %s313
          %319 = dma.hbm_to_vmem [thread:$0]  %s5, 576, %s314, [#allocation13], 64, 64, 4
        $region16: #{sequential_with_adain.1} parent=11 // pred_fallthru
          _
        // Predicated region
        $region17: #{sequential_with_adain.1} parent=11 // pred_check
          %p320 = pneg %p203
        $region18: #{sequential_with_adain.1} parent=11 // pred_check_branch
          %322 = sbr.rel (%p320) target = $region20
        $region19: #{sequential_with_adain.1} parent=11 // pred_region
          %s324 = ssub.s32 64, 64
          %325 = vsyncadd [#allocation13], %s324
          %s327 = sshll.u32 [#allocation14], 4
          %s328 = int_to_ptr.vmem [resolvable:$true] %s327
          %330 = dma.hbm_to_vmem [thread:$0]  %s6, 64, %s328, [#allocation13]
        $region20: #{sequential_with_adain.1} parent=11 // pred_fallthru
          _
        // Predicated region
        $region21: #{sequential_with_adain.1} parent=11 // pred_check
          %p331 = pneg %p224
        $region22: #{sequential_with_adain.1} parent=11 // pred_check_branch
          %333 = sbr.rel (%p331) target = $region24
        $region23: #{sequential_with_adain.1} parent=11 // pred_region
          %s335 = ssub.s32 4096, 4096
          %336 = vsyncadd [#allocation16], %s335
          %s337 = sshll.u32 [#allocation15], 4
          %s338 = int_to_ptr.vmem [resolvable:$true] %s337
          %343 = dma.hbm_to_vmem [thread:$0]  %s7, 4096, %s338, [#allocation16], 128, 128, 8
        $region24: #{sequential_with_adain.1} parent=11 // pred_fallthru
          _
        // Predicated region
        $region25: #{sequential_with_adain.1} parent=11 // pred_check
          %p344 = pneg %p245
        $region26: #{sequential_with_adain.1} parent=11 // pred_check_branch
          %346 = sbr.rel (%p344) target = $region28
        $region27: #{sequential_with_adain.1} parent=11 // pred_region
          %s348 = ssub.s32 512, 512
          %349 = vsyncadd [#allocation16], %s348
          %s350 = sshll.u32 [#allocation17], 4
          %s351 = int_to_ptr.vmem [resolvable:$true] %s350
          %356 = dma.hbm_to_vmem [thread:$0]  %s8, 512, %s351, [#allocation16], 256, 256, 16
        $region28: #{sequential_with_adain.1} parent=11 // pred_fallthru
          _
        // Predicated region
        $region29: #{sequential_with_adain.1} parent=11 // pred_check
          %p357 = pneg %p266
        $region30: #{sequential_with_adain.1} parent=11 // pred_check_branch
          %359 = sbr.rel (%p357) target = $region32
        $region31: #{sequential_with_adain.1} parent=11 // pred_region
          %s361 = ssub.s32 288, 288
          %362 = vsyncadd [#allocation19], %s361
          %s363 = sshll.u32 [#allocation18], 4
          %s364 = int_to_ptr.vmem [resolvable:$true] %s363
          %369 = dma.hbm_to_vmem [thread:$0]  %s9, 288, %s364, [#allocation19], 32, 32, 2
        $region32: #{sequential_with_adain.1} parent=11 // pred_fallthru
          _
      $region12: #{sequential_with_adain.1} parent=5 // pred_fallthru
        _
      %p370 = scmp.lt.s32.totalorder %s31, 2
      // Predicated region
      $region33: #{sequential_with_adain.1} parent=5 // pred_check
        %p371 = pneg %p370
      $region34: #{sequential_with_adain.1} parent=5 // pred_check_branch
        %373 = sbr.rel (%p371) target = $region36
      $region35: #{sequential_with_adain.1} parent=5 // pred_region
        // Predicated region
        $region37: #{sequential_with_adain.1} parent=35 // pred_check
          %p374 = pneg %p51
        $region38: #{sequential_with_adain.1} parent=35 // pred_check_branch
          %376 = sbr.rel (%p374) target = $region40
        $region39: #{sequential_with_adain.1} parent=35 // pred_region
          %s377 = sand.u32 %s41, 1
          %s378 = scalar_lea.sflag [#allocation4], %s377
          %s379 = sand.u32 %s41, 1
          %s380 = smul.addr %s379, 8
          %s381 = scalar_lea.vmem [#allocation3], %s380
          %s383 = ssub.s32 128, 128
          %384 = vsyncadd %s378, %s383
          %s385 = smul.addr %s31, 2
          %s386 = smul.addr %s385, 64
          %s387 = scalar_lea.hbm %s0, %s386
          %s389 = sshll.u32 %s381, 4
          %s390 = int_to_ptr.vmem [resolvable:$true] %s389
          %392 = dma.hbm_to_vmem [thread:$0]  %s387, 128, %s390, %s378
        $region40: #{sequential_with_adain.1} parent=35 // pred_fallthru
          _
        // Predicated region
        $region41: #{sequential_with_adain.1} parent=35 // pred_check
          %p393 = pneg %p77
        $region42: #{sequential_with_adain.1} parent=35 // pred_check_branch
          %395 = sbr.rel (%p393) target = $region44
        $region43: #{sequential_with_adain.1} parent=35 // pred_region
          %s396 = sand.u32 %s31, 1
          %s397 = scalar_lea.sflag [#allocation7], %s396
          %s398 = sand.u32 %s67, 1
          %s399 = smul.addr %s398, 4
          %s400 = scalar_lea.vmem [#allocation6], %s399
          %s402 = ssub.s32 64, 64
          %403 = vsyncadd %s397, %s402
          %s404 = smul.addr %s31, 64
          %s405 = scalar_lea.hbm %s1, %s404
          %s407 = sshll.u32 %s400, 4
          %s408 = int_to_ptr.vmem [resolvable:$true] %s407
          %410 = dma.hbm_to_vmem [thread:$0]  %s405, 64, %s408, %s397
        $region44: #{sequential_with_adain.1} parent=35 // pred_fallthru
          _
        // Predicated region
        $region45: #{sequential_with_adain.1} parent=35 // pred_check
          %p411 = pneg %p103
        $region46: #{sequential_with_adain.1} parent=35 // pred_check_branch
          %413 = sbr.rel (%p411) target = $region48
        $region47: #{sequential_with_adain.1} parent=35 // pred_region
          %s414 = sand.u32 %s31, 1
          %s415 = scalar_lea.sflag [#allocation7], %s414
          %s416 = sand.u32 %s93, 1
          %s417 = smul.addr %s416, 4
          %s418 = scalar_lea.vmem [#allocation8], %s417
          %s420 = ssub.s32 64, 64
          %421 = vsyncadd %s415, %s420
          %s422 = smul.addr %s31, 64
          %s423 = scalar_lea.hbm %s2, %s422
          %s425 = sshll.u32 %s418, 4
          %s426 = int_to_ptr.vmem [resolvable:$true] %s425
          %428 = dma.hbm_to_vmem [thread:$0]  %s423, 64, %s426, %s415
        $region48: #{sequential_with_adain.1} parent=35 // pred_fallthru
          _
        // Predicated region
        $region49: #{sequential_with_adain.1} parent=35 // pred_check
          %p429 = pneg %p129
        $region50: #{sequential_with_adain.1} parent=35 // pred_check_branch
          %431 = sbr.rel (%p429) target = $region52
        $region51: #{sequential_with_adain.1} parent=35 // pred_region
          %s432 = sand.u32 %s31, 1
          %s433 = scalar_lea.sflag [#allocation10], %s432
          %s434 = sand.u32 %s119, 1
          %s435 = smul.addr %s434, 4
          %s436 = scalar_lea.vmem [#allocation9], %s435
          %s438 = ssub.s32 64, 64
          %439 = vsyncadd %s433, %s438
          %s440 = smul.addr %s31, 64
          %s441 = scalar_lea.hbm %s3, %s440
          %s443 = sshll.u32 %s436, 4
          %s444 = int_to_ptr.vmem [resolvable:$true] %s443
          %446 = dma.hbm_to_vmem [thread:$0]  %s441, 64, %s444, %s433
        $region52: #{sequential_with_adain.1} parent=35 // pred_fallthru
          _
        // Predicated region
        $region53: #{sequential_with_adain.1} parent=35 // pred_check
          %p447 = pneg %p155
        $region54: #{sequential_with_adain.1} parent=35 // pred_check_branch
          %449 = sbr.rel (%p447) target = $region56
        $region55: #{sequential_with_adain.1} parent=35 // pred_region
          %s450 = sand.u32 %s31, 1
          %s451 = scalar_lea.sflag [#allocation10], %s450
          %s452 = sand.u32 %s145, 1
          %s453 = smul.addr %s452, 4
          %s454 = scalar_lea.vmem [#allocation11], %s453
          %s456 = ssub.s32 64, 64
          %457 = vsyncadd %s451, %s456
          %s458 = smul.addr %s31, 64
          %s459 = scalar_lea.hbm %s4, %s458
          %s461 = sshll.u32 %s454, 4
          %s462 = int_to_ptr.vmem [resolvable:$true] %s461
          %464 = dma.hbm_to_vmem [thread:$0]  %s459, 64, %s462, %s451
        $region56: #{sequential_with_adain.1} parent=35 // pred_fallthru
          _
      $region36: #{sequential_with_adain.1} parent=5 // pred_fallthru
        _
      %p465 = scmp.le.s32.totalorder 1, %s31
      %p466 = scmp.lt.s32.totalorder %s31, 3
      %p467 = pnand %p465, %p466
      %p468 = pneg %p467
      // Predicated region
      $region57: #{sequential_with_adain.1} parent=5 // pred_check
        _
      $region58: #{sequential_with_adain.1} parent=5 // pred_check_branch
        %470 = sbr.rel (%p467) target = $region60
      $region59: #{sequential_with_adain.1} parent=5 // pred_region
        %s471 = ssub.s32 %s31, 1
        %s472 = sand.u32 %s44, 1
        %s473 = scalar_lea.sflag [#allocation4], %s472
        %s474 = sand.u32 %s44, 1
        %s475 = smul.addr %s474, 8
        %s476 = scalar_lea.vmem [#allocation3], %s475
        // Predicated region
        $region61: #{sequential_with_adain.1} parent=59 // pred_check
          %p477 = pneg %p57
        $region62: #{sequential_with_adain.1} parent=59 // pred_check_branch
          %479 = sbr.rel (%p477) target = $region64
        $region63: #{sequential_with_adain.1} parent=59 // pred_region
          %480 = dma.done %s473, 128
        $region64: #{sequential_with_adain.1} parent=59 // pred_fallthru
          _
        %s481 = sand.u32 %s36, 1
        %s482 = scalar_lea.sflag [#allocation7], %s481
        %s483 = sand.u32 %s70, 1
        %s484 = smul.addr %s483, 4
        %s485 = scalar_lea.vmem [#allocation6], %s484
        // Predicated region
        $region65: #{sequential_with_adain.1} parent=59 // pred_check
          %p486 = pneg %p83
        $region66: #{sequential_with_adain.1} parent=59 // pred_check_branch
          %488 = sbr.rel (%p486) target = $region68
        $region67: #{sequential_with_adain.1} parent=59 // pred_region
          %489 = dma.done %s482, 64
        $region68: #{sequential_with_adain.1} parent=59 // pred_fallthru
          _
        %s490 = sand.u32 %s36, 1
        %s491 = scalar_lea.sflag [#allocation7], %s490
        %s492 = sand.u32 %s96, 1
        %s493 = smul.addr %s492, 4
        %s494 = scalar_lea.vmem [#allocation8], %s493
        // Predicated region
        $region69: #{sequential_with_adain.1} parent=59 // pred_check
          %p495 = pneg %p109
        $region70: #{sequential_with_adain.1} parent=59 // pred_check_branch
          %497 = sbr.rel (%p495) target = $region72
        $region71: #{sequential_with_adain.1} parent=59 // pred_region
          %498 = dma.done %s491, 64
        $region72: #{sequential_with_adain.1} parent=59 // pred_fallthru
          _
        %s499 = sand.u32 %s36, 1
        %s500 = scalar_lea.sflag [#allocation10], %s499
        %s501 = sand.u32 %s122, 1
        %s502 = smul.addr %s501, 4
        %s503 = scalar_lea.vmem [#allocation9], %s502
        // Predicated region
        $region73: #{sequential_with_adain.1} parent=59 // pred_check
          %p504 = pneg %p135
        $region74: #{sequential_with_adain.1} parent=59 // pred_check_branch
          %506 = sbr.rel (%p504) target = $region76
        $region75: #{sequential_with_adain.1} parent=59 // pred_region
          %507 = dma.done %s500, 64
        $region76: #{sequential_with_adain.1} parent=59 // pred_fallthru
          _
        %s508 = sand.u32 %s36, 1
        %s509 = scalar_lea.sflag [#allocation10], %s508
        %s510 = sand.u32 %s148, 1
        %s511 = smul.addr %s510, 4
        %s512 = scalar_lea.vmem [#allocation11], %s511
        // Predicated region
        $region77: #{sequential_with_adain.1} parent=59 // pred_check
          %p513 = pneg %p161
        $region78: #{sequential_with_adain.1} parent=59 // pred_check_branch
          %515 = sbr.rel (%p513) target = $region80
        $region79: #{sequential_with_adain.1} parent=59 // pred_region
          %516 = dma.done %s509, 64
        $region80: #{sequential_with_adain.1} parent=59 // pred_fallthru
          _
        // Predicated region
        $region81: #{sequential_with_adain.1} parent=59 // pred_check
          %p517 = pneg %p182
        $region82: #{sequential_with_adain.1} parent=59 // pred_check_branch
          %519 = sbr.rel (%p517) target = $region84
        $region83: #{sequential_with_adain.1} parent=59 // pred_region
          %520 = dma.done [#allocation13], 576
        $region84: #{sequential_with_adain.1} parent=59 // pred_fallthru
          _
        // Predicated region
        $region85: #{sequential_with_adain.1} parent=59 // pred_check
          %p521 = pneg %p203
        $region86: #{sequential_with_adain.1} parent=59 // pred_check_branch
          %523 = sbr.rel (%p521) target = $region88
        $region87: #{sequential_with_adain.1} parent=59 // pred_region
          %524 = dma.done [#allocation13], 64
        $region88: #{sequential_with_adain.1} parent=59 // pred_fallthru
          _
        // Predicated region
        $region89: #{sequential_with_adain.1} parent=59 // pred_check
          %p525 = pneg %p224
        $region90: #{sequential_with_adain.1} parent=59 // pred_check_branch
          %527 = sbr.rel (%p525) target = $region92
        $region91: #{sequential_with_adain.1} parent=59 // pred_region
          %528 = dma.done [#allocation16], 4096
        $region92: #{sequential_with_adain.1} parent=59 // pred_fallthru
          _
        // Predicated region
        $region93: #{sequential_with_adain.1} parent=59 // pred_check
          %p529 = pneg %p245
        $region94: #{sequential_with_adain.1} parent=59 // pred_check_branch
          %531 = sbr.rel (%p529) target = $region96
        $region95: #{sequential_with_adain.1} parent=59 // pred_region
          %532 = dma.done [#allocation16], 512
        $region96: #{sequential_with_adain.1} parent=59 // pred_fallthru
          _
        // Predicated region
        $region97: #{sequential_with_adain.1} parent=59 // pred_check
          %p533 = pneg %p266
        $region98: #{sequential_with_adain.1} parent=59 // pred_check_branch
          %535 = sbr.rel (%p533) target = $region100
        $region99: #{sequential_with_adain.1} parent=59 // pred_region
          %536 = dma.done [#allocation19], 288
        $region100: #{sequential_with_adain.1} parent=59 // pred_fallthru
          _
        %s537 = sand.u32 %s44, 1
        %s538 = scalar_lea.sflag [#allocation4], %s537
        %s539 = sand.u32 %s44, 1
        %s540 = smul.addr %s539, 8
        %s541 = scalar_lea.vmem [#allocation3], %s540
        %p542 = pneg %p57
        %p543 = pneg %p54
        %s544 = sand.u32 %s36, 1
        %s545 = scalar_lea.sflag [#allocation7], %s544
        %s546 = sand.u32 %s70, 1
        %s547 = smul.addr %s546, 4
        %s548 = scalar_lea.vmem [#allocation6], %s547
        %p549 = pneg %p83
        %p550 = pneg %p80
        %s551 = sand.u32 %s36, 1
        %s552 = scalar_lea.sflag [#allocation7], %s551
        %s553 = sand.u32 %s96, 1
        %s554 = smul.addr %s553, 4
        %s555 = scalar_lea.vmem [#allocation8], %s554
        %p556 = pneg %p109
        %p557 = pneg %p106
        %s558 = sand.u32 %s36, 1
        %s559 = scalar_lea.sflag [#allocation10], %s558
        %s560 = sand.u32 %s122, 1
        %s561 = smul.addr %s560, 4
        %s562 = scalar_lea.vmem [#allocation9], %s561
        %p563 = pneg %p135
        %p564 = pneg %p132
        %s565 = sand.u32 %s36, 1
        %s566 = scalar_lea.sflag [#allocation10], %s565
        %s567 = sand.u32 %s148, 1
        %s568 = smul.addr %s567, 4
        %s569 = scalar_lea.vmem [#allocation11], %s568
        %p570 = pneg %p161
        %p571 = pneg %p158
        %p572 = pneg %p182
        %p573 = pneg %p179
        %p574 = pneg %p203
        %p575 = pneg %p200
        %p576 = pneg %p224
        %p577 = pneg %p221
        %p578 = pneg %p245
        %p579 = pneg %p242
        %p580 = pneg %p266
        %p581 = pneg %p263
        %p582 = pneg %p292
        %p583 = pneg %p289
        %s584 = sand.u32 %s279, 1
        %s585 = scalar_lea.sflag [#allocation5], %s584
        %s586 = sand.u32 %s279, 1
        %s587 = smul.addr %s586, 8
        %s588 = scalar_lea.vmem [#allocation20], %s587
        %v589 = vld [vmem:[%s476] sm:$0xff]
        %v590 = vld [vmem:[#allocation15] sm:$0xff]
        %v591 = vld [vmem:[#allocation15 + $0x8] sm:$0xff]
        %v592 = vld [vmem:[#allocation15 + $0x10] sm:$0xff]
        %v593 = vld [vmem:[#allocation15 + $0x18] sm:$0xff]
        %v594 = vld [vmem:[#allocation15 + $0x20] sm:$0xff]
        %v595 = vld [vmem:[#allocation15 + $0x28] sm:$0xff]
        %v596 = vld [vmem:[#allocation15 + $0x30] sm:$0xff]
        %v597 = vld [vmem:[#allocation15 + $0x38] sm:$0xff]
        %v598 = vld [vmem:[#allocation15 + $0x40] sm:$0xff]
        %v599 = vld [vmem:[#allocation15 + $0x48] sm:$0xff]
        %v600 = vld [vmem:[#allocation15 + $0x50] sm:$0xff]
        %v601 = vld [vmem:[#allocation15 + $0x58] sm:$0xff]
        %v602 = vld [vmem:[#allocation15 + $0x60] sm:$0xff]
        %v603 = vld [vmem:[#allocation15 + $0x68] sm:$0xff]
        %v604 = vld [vmem:[#allocation15 + $0x70] sm:$0xff]
        %v605 = vld [vmem:[#allocation15 + $0x78] sm:$0xff]
        %v606 = vld [vmem:[#allocation15 + $0x80] sm:$0xff]
        %v607 = vld [vmem:[#allocation15 + $0x88] sm:$0xff]
        %v608 = vld [vmem:[#allocation15 + $0x90] sm:$0xff]
        %v609 = vld [vmem:[#allocation15 + $0x98] sm:$0xff]
        %v610 = vld [vmem:[#allocation15 + $0xa0] sm:$0xff]
        %v611 = vld [vmem:[#allocation15 + $0xa8] sm:$0xff]
        %v612 = vld [vmem:[#allocation15 + $0xb0] sm:$0xff]
        %v613 = vld [vmem:[#allocation15 + $0xb8] sm:$0xff]
        %v614 = vld [vmem:[#allocation15 + $0xc0] sm:$0xff]
        %v615 = vld [vmem:[#allocation15 + $0xc8] sm:$0xff]
        %v616 = vld [vmem:[#allocation15 + $0xd0] sm:$0xff]
        %v617 = vld [vmem:[#allocation15 + $0xd8] sm:$0xff]
        %v618 = vld [vmem:[#allocation15 + $0xe0] sm:$0xff]
        %v619 = vld [vmem:[#allocation15 + $0xe8] sm:$0xff]
        %v620 = vld [vmem:[#allocation15 + $0xf0] sm:$0xff]
        %v621 = vld [vmem:[#allocation15 + $0xf8] sm:$0xff]
        %v622 = vld [vmem:[#allocation17] sm:$0xff]
        %v623 = vld [vmem:[#allocation17 + $0x8] sm:$0xff]
        %v624 = vld [vmem:[#allocation17 + $0x10] sm:$0xff]
        %v625 = vld [vmem:[#allocation17 + $0x18] sm:$0xff]
        %v626 = vld [vmem:[%s485] sm:$0xf]
        %v627 = vld [vmem:[%s494] sm:$0xf]
        %v629 = vcombine.high %v589, %v589
        %vm631 = vcmask 1043456
        %v632 = vsel %vm631, %v589, 0.0
        %v633 = vsel %vm631, %v629, 0.0
        %v634 = vadd.f32 %v632, %v633
        %635 = vadd.xlane.f32.xlu0 %v634
        %v636 = vpop.xlane.xlu0 %635
        %v637 = vrcp.pop 256.0
        %v638 = vmul.f32 %v636, %v637
        %v639 = vsel %vm631, %v638, 0.0
        %v640 = vrot.slane %v639, 4
        %v641 = vadd.f32 %v639, %v640
        %v642 = vrot.slane %v641, 2
        %v643 = vadd.f32 %v641, %v642
        %v644 = vrot.slane %v643, 1
        %v645 = vadd.f32 %v643, %v644
        %v646 = vrcp.pop 4.0
        %v647 = vmul.f32 %v645, %v646
        %648 = vmatprep.subr.mxu0 0.0
        %649 = vmatpush1.msra.mxu0 %v590
        %650 = vmatprep.subr.mxu0 0.0
        %651 = vmatpush1.msra.mxu0 %v591
        %652 = vmatprep.subr.mxu0 0.0
        %653 = vmatpush1.msra.mxu0 %v592
        %654 = vmatprep.subr.mxu0 0.0
        %655 = vmatpush1.msra.mxu0 %v593
        %656 = vmatprep.subr.mxu0 0.0
        %657 = vmatpush1.msra.mxu0 %v594
        %658 = vmatprep.subr.mxu0 0.0
        %659 = vmatpush1.msra.mxu0 %v595
        %660 = vmatprep.subr.mxu0 0.0
        %661 = vmatpush1.msra.mxu0 %v596
        %662 = vmatprep.subr.mxu0 0.0
        %663 = vmatpush1.msra.mxu0 %v597
        %664 = vmatprep.subr.mxu0 0.0
        %665 = vmatpush1.msra.mxu0 %v598
        %666 = vmatprep.subr.mxu0 0.0
        %667 = vmatpush1.msra.mxu0 %v599
        %668 = vmatprep.subr.mxu0 0.0
        %669 = vmatpush1.msra.mxu0 %v600
        %670 = vmatprep.subr.mxu0 0.0
        %671 = vmatpush1.msra.mxu0 %v601
        %672 = vmatprep.subr.mxu0 0.0
        %673 = vmatpush1.msra.mxu0 %v602
        %674 = vmatprep.subr.mxu0 0.0
        %675 = vmatpush1.msra.mxu0 %v603
        %676 = vmatprep.subr.mxu0 0.0
        %677 = vmatpush1.msra.mxu0 %v604
        %678 = vmatprep.subr.mxu0 0.0
        %679 = vmatpush1.msra.mxu0 %v605
        %680 = vmatprep.subr.mxu0 0.0
        %681 = vmatpush1.msra.mxu0 %v606
        %682 = vmatprep.subr.mxu0 0.0
        %683 = vmatpush1.msra.mxu0 %v607
        %684 = vmatprep.subr.mxu0 0.0
        %685 = vmatpush1.msra.mxu0 %v608
        %686 = vmatprep.subr.mxu0 0.0
        %687 = vmatpush1.msra.mxu0 %v609
        %688 = vmatprep.subr.mxu0 0.0
        %689 = vmatpush1.msra.mxu0 %v610
        %690 = vmatprep.subr.mxu0 0.0
        %691 = vmatpush1.msra.mxu0 %v611
        %692 = vmatprep.subr.mxu0 0.0
        %693 = vmatpush1.msra.mxu0 %v612
        %694 = vmatprep.subr.mxu0 0.0
        %695 = vmatpush1.msra.mxu0 %v613
        %696 = vmatprep.subr.mxu0 0.0
        %697 = vmatpush1.msra.mxu0 %v614
        %698 = vmatprep.subr.mxu0 0.0
        %699 = vmatpush1.msra.mxu0 %v615
        %700 = vmatprep.subr.mxu0 0.0
        %701 = vmatpush1.msra.mxu0 %v616
        %702 = vmatprep.subr.mxu0 0.0
        %703 = vmatpush1.msra.mxu0 %v617
        %704 = vmatprep.subr.mxu0 0.0
        %705 = vmatpush1.msra.mxu0 %v618
        %706 = vmatprep.subr.mxu0 0.0
        %707 = vmatpush1.msra.mxu0 %v619
        %708 = vmatprep.subr.mxu0 0.0
        %709 = vmatpush1.msra.mxu0 %v620
        %710 = vmatprep.subr.mxu0 0.0
        %711 = vmatpush1.msra.mxu0 %v621
        %712 = vmatprep.mubr.f32.mxu0 %v629
        %713 = vmatmul.mubr.f32.gmra.mrb[0].mxu0 %v589
        %v714 = vpop.f32.mrb[0].mxu0
        %v715 = vadd.f32 0.0, %v714
        %v716 = vpop.f32.mrb[0].mxu0
        %717 = vdwg.mxu0
        %v718 = vmul.f32 %v715, 0.0625
        %vm719 = vcmask 130048
        %v721 = vsel %vm719, %v718, 0
        %723 = vmatprep.subr.mxu0 %v623
        %724 = vmatpush1.msra.mxu0 %v622
        %725 = vmatprep.subr.mxu0 %v625
        %726 = vmatpush1.msra.mxu0 %v624
        %727 = vmatprep.subr.mxu0 0.0
        %728 = vmatpush1.msra.mxu0 0.0
        %729 = vmatprep.subr.mxu0 0.0
        %730 = vmatpush1.msra.mxu0 0.0
        %731 = vmatprep.subr.mxu0 0.0
        %732 = vmatpush1.msra.mxu0 0.0
        %733 = vmatprep.subr.mxu0 0.0
        %734 = vmatpush1.msra.mxu0 0.0
        %735 = vmatprep.subr.mxu0 0.0
        %736 = vmatpush1.msra.mxu0 0.0
        %737 = vmatprep.subr.mxu0 0.0
        %738 = vmatpush1.msra.mxu0 0.0
        %739 = vmatprep.subr.mxu0 0.0
        %740 = vmatpush1.msra.mxu0 0.0
        %741 = vmatprep.subr.mxu0 0.0
        %742 = vmatpush1.msra.mxu0 0.0
        %743 = vmatprep.subr.mxu0 0.0
        %744 = vmatpush1.msra.mxu0 0.0
        %745 = vmatprep.subr.mxu0 0.0
        %746 = vmatpush1.msra.mxu0 0.0
        %747 = vmatprep.subr.mxu0 0.0
        %748 = vmatpush1.msra.mxu0 0.0
        %749 = vmatprep.subr.mxu0 0.0
        %750 = vmatpush1.msra.mxu0 0.0
        %751 = vmatprep.subr.mxu0 0.0
        %752 = vmatpush1.msra.mxu0 0.0
        %753 = vmatprep.subr.mxu0 0.0
        %754 = vmatpush1.msra.mxu0 0.0
        %755 = vmatprep.subr.mxu0 0.0
        %756 = vmatpush1.msra.mxu0 0.0
        %757 = vmatprep.subr.mxu0 0.0
        %758 = vmatpush1.msra.mxu0 0.0
        %759 = vmatprep.subr.mxu0 0.0
        %760 = vmatpush1.msra.mxu0 0.0
        %761 = vmatprep.subr.mxu0 0.0
        %762 = vmatpush1.msra.mxu0 0.0
        %763 = vmatprep.subr.mxu0 0.0
        %764 = vmatpush1.msra.mxu0 0.0
        %765 = vmatprep.subr.mxu0 0.0
        %766 = vmatpush1.msra.mxu0 0.0
        %767 = vmatprep.subr.mxu0 0.0
        %768 = vmatpush1.msra.mxu0 0.0
        %769 = vmatprep.subr.mxu0 0.0
        %770 = vmatpush1.msra.mxu0 0.0
        %771 = vmatprep.subr.mxu0 0.0
        %772 = vmatpush1.msra.mxu0 0.0
        %773 = vmatprep.subr.mxu0 0.0
        %774 = vmatpush1.msra.mxu0 0.0
        %775 = vmatprep.subr.mxu0 0.0
        %776 = vmatpush1.msra.mxu0 0.0
        %777 = vmatprep.subr.mxu0 0.0
        %778 = vmatpush1.msra.mxu0 0.0
        %779 = vmatprep.subr.mxu0 0.0
        %780 = vmatpush1.msra.mxu0 0.0
        %781 = vmatprep.subr.mxu0 0.0
        %782 = vmatpush1.msra.mxu0 0.0
        %783 = vmatprep.subr.mxu0 0.0
        %784 = vmatpush1.msra.mxu0 0.0
        %785 = vmatprep.subr.mxu0 0.0
        %786 = vmatpush1.msra.mxu0 0.0
        %787 = vmatprep.mubr.f32.mxu0 0.0
        %788 = vmatmul.mubr.f32.gmra.mrb[0].mxu0 %v721
        %v789 = vpop.f32.mrb[0].mxu0
        %v790 = vadd.f32 0.0, %v789
        %v791 = vpop.f32.mrb[0].mxu0
        %v792 = vadd.f32 0.0, %v791
        %793 = vdwg.mxu0
        %v796 = vcombine.low %v790, %v792
        %v798 = vsub.f32 %v589, %v796
        %v799 = vmul.f32 %v798, %v798
        %v801 = vcombine.high %v799, %v799
        %803 = vmatprep.subr.mxu0 0.0
        %804 = vmatpush1.msra.mxu0 %v590
        %805 = vmatprep.subr.mxu0 0.0
        %806 = vmatpush1.msra.mxu0 %v591
        %807 = vmatprep.subr.mxu0 0.0
        %808 = vmatpush1.msra.mxu0 %v592
        %809 = vmatprep.subr.mxu0 0.0
        %810 = vmatpush1.msra.mxu0 %v593
        %811 = vmatprep.subr.mxu0 0.0
        %812 = vmatpush1.msra.mxu0 %v594
        %813 = vmatprep.subr.mxu0 0.0
        %814 = vmatpush1.msra.mxu0 %v595
        %815 = vmatprep.subr.mxu0 0.0
        %816 = vmatpush1.msra.mxu0 %v596
        %817 = vmatprep.subr.mxu0 0.0
        %818 = vmatpush1.msra.mxu0 %v597
        %819 = vmatprep.subr.mxu0 0.0
        %820 = vmatpush1.msra.mxu0 %v598
        %821 = vmatprep.subr.mxu0 0.0
        %822 = vmatpush1.msra.mxu0 %v599
        %823 = vmatprep.subr.mxu0 0.0
        %824 = vmatpush1.msra.mxu0 %v600
        %825 = vmatprep.subr.mxu0 0.0
        %826 = vmatpush1.msra.mxu0 %v601
        %827 = vmatprep.subr.mxu0 0.0
        %828 = vmatpush1.msra.mxu0 %v602
        %829 = vmatprep.subr.mxu0 0.0
        %830 = vmatpush1.msra.mxu0 %v603
        %831 = vmatprep.subr.mxu0 0.0
        %832 = vmatpush1.msra.mxu0 %v604
        %833 = vmatprep.subr.mxu0 0.0
        %834 = vmatpush1.msra.mxu0 %v605
        %835 = vmatprep.subr.mxu0 0.0
        %836 = vmatpush1.msra.mxu0 %v606
        %837 = vmatprep.subr.mxu0 0.0
        %838 = vmatpush1.msra.mxu0 %v607
        %839 = vmatprep.subr.mxu0 0.0
        %840 = vmatpush1.msra.mxu0 %v608
        %841 = vmatprep.subr.mxu0 0.0
        %842 = vmatpush1.msra.mxu0 %v609
        %843 = vmatprep.subr.mxu0 0.0
        %844 = vmatpush1.msra.mxu0 %v610
        %845 = vmatprep.subr.mxu0 0.0
        %846 = vmatpush1.msra.mxu0 %v611
        %847 = vmatprep.subr.mxu0 0.0
        %848 = vmatpush1.msra.mxu0 %v612
        %849 = vmatprep.subr.mxu0 0.0
        %850 = vmatpush1.msra.mxu0 %v613
        %851 = vmatprep.subr.mxu0 0.0
        %852 = vmatpush1.msra.mxu0 %v614
        %853 = vmatprep.subr.mxu0 0.0
        %854 = vmatpush1.msra.mxu0 %v615
        %855 = vmatprep.subr.mxu0 0.0
        %856 = vmatpush1.msra.mxu0 %v616
        %857 = vmatprep.subr.mxu0 0.0
        %858 = vmatpush1.msra.mxu0 %v617
        %859 = vmatprep.subr.mxu0 0.0
        %860 = vmatpush1.msra.mxu0 %v618
        %861 = vmatprep.subr.mxu0 0.0
        %862 = vmatpush1.msra.mxu0 %v619
        %863 = vmatprep.subr.mxu0 0.0
        %864 = vmatpush1.msra.mxu0 %v620
        %865 = vmatprep.subr.mxu0 0.0
        %866 = vmatpush1.msra.mxu0 %v621
        %867 = vmatprep.mubr.f32.mxu0 %v801
        %868 = vmatmul.mubr.f32.gmra.mrb[0].mxu0 %v799
        %v869 = vpop.f32.mrb[0].mxu0
        %v870 = vadd.f32 0.0, %v869
        %v871 = vpop.f32.mrb[0].mxu0
        %872 = vdwg.mxu0
        %v873 = vmul.f32 %v870, 0.06666667
        %v874 = vrsqrt.pop %v873
        %v875 = vmul.f32 %v873, %v874
        %vm876 = vcmp.eq.f32.partialorder %v873, inf
        %v877 = vsel %vm876, %v873, %v875
        %vm878 = vcmp.eq.f32.partialorder %v873, 0.0
        %v879 = vand.u32 %v873, 2147483648
        %v880 = vsel %vm878, %v879, %v877
        %vm881 = vcmask 125952
        %v882 = vsel %vm881, %v880, 0.0
        %883 = vadd.xlane.f32.xlu0 %v882
        %v884 = vpop.xlane.xlu0 %883
        %v885 = vrcp.pop 16.0
        %v886 = vmul.f32 %v884, %v885
        %v887 = vsub.f32 %v880, %v886
        %v888 = vmul.f32 %v887, %v887
        %v889 = vsel %vm881, %v888, 0.0
        %890 = vadd.xlane.f32.xlu0 %v889
        %v891 = vpop.xlane.xlu0 %890
        %v892 = vmul.f32 %v891, 0.06666667
        %v893 = vrsqrt.pop %v892
        %v894 = vmul.f32 %v892, %v893
        %vm895 = vcmp.eq.f32.partialorder %v892, inf
        %v896 = vsel %vm895, %v892, %v894
        %vm897 = vcmp.eq.f32.partialorder %v892, 0.0
        %v898 = vand.u32 %v892, 2147483648
        %v899 = vsel %vm897, %v898, %v896
        %v900 = vsel %vm631, %v899, 0.0
        %v901 = vrot.slane %v900, 4
        %v902 = vadd.f32 %v900, %v901
        %v903 = vrot.slane %v902, 2
        %v904 = vadd.f32 %v902, %v903
        %v905 = vrot.slane %v904, 1
        %v906 = vadd.f32 %v904, %v905
        %v907 = vmul.f32 %v906, %v646
        %v908 = vsub.f32 %v899, %v907
        %v909 = vmul.f32 %v908, %v908
        %v910 = vsel %vm631, %v909, 0.0
        %v911 = vrot.slane %v910, 4
        %v912 = vadd.f32 %v910, %v911
        %v913 = vrot.slane %v912, 2
        %v914 = vadd.f32 %v912, %v913
        %v915 = vrot.slane %v914, 1
        %v916 = vadd.f32 %v914, %v915
        %v917 = vmul.f32 %v916, 0.33333334
        %v918 = vadd.f32 %v917, 1e-08
        %v919 = vrsqrt.pop %v918
        %v920 = vsub.f32 %v589, %v647
        %v921 = vmul.f32 %v920, %v919
        %923 = vset.pattern.permute.xlu0 0
        %924 = vperm.xlu0 %923, %v626
        %v925 = vpop.permute.xlu0 %924
        %v927 = vunpack.c.l.s4 839922192
        %v928 = vunpack.c.0.s8 %v927
        %v929 = vlaneseq
        %v930 = vshrl.u32 %v929, 7
        %v931 = vsub.s32 %v928, %v930
        %v932 = vrot.slane %v925, %v931
        %v934 = vmul.f32 %v921, %v932
        %936 = vset.pattern.permute.xlu0 0
        %937 = vperm.xlu0 %936, %v627
        %v938 = vpop.permute.xlu0 %937
        %v940 = vunpack.c.l.s4 839922192
        %v941 = vunpack.c.0.s8 %v940
        %v942 = vlaneseq
        %v943 = vshrl.u32 %v942, 7
        %v944 = vsub.s32 %v941, %v943
        %v945 = vrot.slane %v938, %v944
        %v947 = vadd.f32 %v934, %v945
        %948 = vst [vmem:[#allocation2] sm:$0xff] 0.0
        %949 = vst [vmem:[#allocation2 + $0x8] sm:$0xff] 0.0
        %950 = vst [vmem:[#allocation2 + $0x4] sm:$0xff] %v947
        %v951 = vld [vmem:[#allocation2] sm:$0xff]
        %v952 = vld [vmem:[#allocation2 + $0x8] sm:$0xf]
        %v953 = vld [vmem:[#allocation18] sm:$0x3]
        %v955 = vlaneseq
        %v956 = vshrl.u32 %v955, 7
        %v957 = vsub.s32 0, %v956
        %v958 = vrot.slane %v953, %v957
        %v959 = vlaneseq
        %v960 = vshrl.u32 %v959, 7
        %v961 = vsub.s32 1, %v960
        %v962 = vrot.slane %v953, %v961
        %v963 = vcombine.low %v958, %v962
        %964 = vrot.lane.b32.xlu0 %v963, 111
        %v965 = vpop.permute.xlu0 %964
        %v966 = vrot.slane %v965, 4
        %vm967 = vcmask 908288
        %v968 = vsel %vm967, %v966, %v965
        %v971 = vmul.f32 %v951, %v968
        %v972 = vmul.f32 %v952, %v966
        %v973 = vld [vmem:[#allocation12] sm:$0xf]
        %s974 = scalar_lea.vmem [#allocation18], 2
        %v975 = vld [vmem:[%s974] sm:$0x3]
        %v977 = vlaneseq
        %v978 = vshrl.u32 %v977, 7
        %v979 = vsub.s32 0, %v978
        %v980 = vrot.slane %v975, %v979
        %v981 = vlaneseq
        %v982 = vshrl.u32 %v981, 7
        %v983 = vsub.s32 1, %v982
        %v984 = vrot.slane %v975, %v983
        %v985 = vcombine.low %v980, %v984
        %986 = vrot.lane.b32.xlu0 %v985, 112
        %v987 = vpop.permute.xlu0 %986
        %v988 = vrot.slane %v987, 4
        %vm989 = vcmask 916480
        %v990 = vsel %vm989, %v988, %v987
        %v993 = vmul.f32 %v951, %v990
        %v994 = vmul.f32 %v952, %v988
        %s995 = scalar_lea.vmem [#allocation12], 4
        %v996 = vld [vmem:[%s995] sm:$0xf]
        %v999 = vcombine.high %v993, %v993
        %1000 = vrot.lane.b32.xlu0 %v993, 16
        %v1001 = vpop.permute.xlu0 %1000
        %1002 = vrot.lane.b32.xlu0 %v999, 16
        %v1003 = vpop.permute.xlu0 %1002
        %1004 = vrot.lane.b32.xlu0 %v994, 16
        %v1005 = vpop.permute.xlu0 %1004
        %v1006 = vsel %vm719, %v1001, %v1003
        %v1007 = vsel %vm719, %v1003, %v1005
        %vm1008 = vcmask 31744
        %v1010 = vsel %vm1008, %v996, 0
        %v1012 = vsel %vm631, %v1006, 0
        %v1014 = vsel %vm631, %v1007, 0
        %1016 = vmatprep.subr.mxu0 %v1014
        %1017 = vmatpush1.msra.mxu0 %v1012
        %1018 = vmatprep.subr.mxu0 0.0
        %1019 = vmatpush1.msra.mxu0 0.0
        %1020 = vmatprep.subr.mxu0 0.0
        %1021 = vmatpush1.msra.mxu0 0.0
        %1022 = vmatprep.subr.mxu0 0.0
        %1023 = vmatpush1.msra.mxu0 0.0
        %1024 = vmatprep.subr.mxu0 0.0
        %1025 = vmatpush1.msra.mxu0 0.0
        %1026 = vmatprep.subr.mxu0 0.0
        %1027 = vmatpush1.msra.mxu0 0.0
        %1028 = vmatprep.subr.mxu0 0.0
        %1029 = vmatpush1.msra.mxu0 0.0
        %1030 = vmatprep.subr.mxu0 0.0
        %1031 = vmatpush1.msra.mxu0 0.0
        %1032 = vmatprep.subr.mxu0 0.0
        %1033 = vmatpush1.msra.mxu0 0.0
        %1034 = vmatprep.subr.mxu0 0.0
        %1035 = vmatpush1.msra.mxu0 0.0
        %1036 = vmatprep.subr.mxu0 0.0
        %1037 = vmatpush1.msra.mxu0 0.0
        %1038 = vmatprep.subr.mxu0 0.0
        %1039 = vmatpush1.msra.mxu0 0.0
        %1040 = vmatprep.subr.mxu0 0.0
        %1041 = vmatpush1.msra.mxu0 0.0
        %1042 = vmatprep.subr.mxu0 0.0
        %1043 = vmatpush1.msra.mxu0 0.0
        %1044 = vmatprep.subr.mxu0 0.0
        %1045 = vmatpush1.msra.mxu0 0.0
        %1046 = vmatprep.subr.mxu0 0.0
        %1047 = vmatpush1.msra.mxu0 0.0
        %1048 = vmatprep.subr.mxu0 0.0
        %1049 = vmatpush1.msra.mxu0 0.0
        %1050 = vmatprep.subr.mxu0 0.0
        %1051 = vmatpush1.msra.mxu0 0.0
        %1052 = vmatprep.subr.mxu0 0.0
        %1053 = vmatpush1.msra.mxu0 0.0
        %1054 = vmatprep.subr.mxu0 0.0
        %1055 = vmatpush1.msra.mxu0 0.0
        %1056 = vmatprep.subr.mxu0 0.0
        %1057 = vmatpush1.msra.mxu0 0.0
        %1058 = vmatprep.subr.mxu0 0.0
        %1059 = vmatpush1.msra.mxu0 0.0
        %1060 = vmatprep.subr.mxu0 0.0
        %1061 = vmatpush1.msra.mxu0 0.0
        %1062 = vmatprep.subr.mxu0 0.0
        %1063 = vmatpush1.msra.mxu0 0.0
        %1064 = vmatprep.subr.mxu0 0.0
        %1065 = vmatpush1.msra.mxu0 0.0
        %1066 = vmatprep.subr.mxu0 0.0
        %1067 = vmatpush1.msra.mxu0 0.0
        %1068 = vmatprep.subr.mxu0 0.0
        %1069 = vmatpush1.msra.mxu0 0.0
        %1070 = vmatprep.subr.mxu0 0.0
        %1071 = vmatpush1.msra.mxu0 0.0
        %1072 = vmatprep.subr.mxu0 0.0
        %1073 = vmatpush1.msra.mxu0 0.0
        %1074 = vmatprep.subr.mxu0 0.0
        %1075 = vmatpush1.msra.mxu0 0.0
        %1076 = vmatprep.subr.mxu0 0.0
        %1077 = vmatpush1.msra.mxu0 0.0
        %1078 = vmatprep.subr.mxu0 0.0
        %1079 = vmatpush1.msra.mxu0 0.0
        %1080 = vmatprep.mubr.f32.mxu0 0.0
        %1081 = vmatmul.mubr.f32.gmra.mrb[0].mxu0 %v1010
        %v1082 = vpop.f32.mrb[0].mxu0
        %v1083 = vadd.f32 0.0, %v1082
        %v1084 = vpop.f32.mrb[0].mxu0
        %v1085 = vadd.f32 0.0, %v1084
        %1086 = vdwg.mxu0
        %v1089 = vcombine.high %v971, %v971
        %1090 = vrot.lane.b32.xlu0 %v971, 17
        %v1091 = vpop.permute.xlu0 %1090
        %1092 = vrot.lane.b32.xlu0 %v1089, 17
        %v1093 = vpop.permute.xlu0 %1092
        %1094 = vrot.lane.b32.xlu0 %v972, 17
        %v1095 = vpop.permute.xlu0 %1094
        %vm1096 = vcmask 138240
        %v1097 = vsel %vm1096, %v1091, %v1093
        %v1098 = vsel %vm1096, %v1093, %v1095
        %v1100 = vsel %vm1008, %v973, 0
        %v1102 = vsel %vm631, %v1097, 0
        %v1104 = vsel %vm631, %v1098, 0
        %1106 = vmatprep.subr.mxu0 %v1104
        %1107 = vmatpush1.msra.mxu0 %v1102
        %1108 = vmatprep.subr.mxu0 0.0
        %1109 = vmatpush1.msra.mxu0 0.0
        %1110 = vmatprep.subr.mxu0 0.0
        %1111 = vmatpush1.msra.mxu0 0.0
        %1112 = vmatprep.subr.mxu0 0.0
        %1113 = vmatpush1.msra.mxu0 0.0
        %1114 = vmatprep.subr.mxu0 0.0
        %1115 = vmatpush1.msra.mxu0 0.0
        %1116 = vmatprep.subr.mxu0 0.0
        %1117 = vmatpush1.msra.mxu0 0.0
        %1118 = vmatprep.subr.mxu0 0.0
        %1119 = vmatpush1.msra.mxu0 0.0
        %1120 = vmatprep.subr.mxu0 0.0
        %1121 = vmatpush1.msra.mxu0 0.0
        %1122 = vmatprep.subr.mxu0 0.0
        %1123 = vmatpush1.msra.mxu0 0.0
        %1124 = vmatprep.subr.mxu0 0.0
        %1125 = vmatpush1.msra.mxu0 0.0
        %1126 = vmatprep.subr.mxu0 0.0
        %1127 = vmatpush1.msra.mxu0 0.0
        %1128 = vmatprep.subr.mxu0 0.0
        %1129 = vmatpush1.msra.mxu0 0.0
        %1130 = vmatprep.subr.mxu0 0.0
        %1131 = vmatpush1.msra.mxu0 0.0
        %1132 = vmatprep.subr.mxu0 0.0
        %1133 = vmatpush1.msra.mxu0 0.0
        %1134 = vmatprep.subr.mxu0 0.0
        %1135 = vmatpush1.msra.mxu0 0.0
        %1136 = vmatprep.subr.mxu0 0.0
        %1137 = vmatpush1.msra.mxu0 0.0
        %1138 = vmatprep.subr.mxu0 0.0
        %1139 = vmatpush1.msra.mxu0 0.0
        %1140 = vmatprep.subr.mxu0 0.0
        %1141 = vmatpush1.msra.mxu0 0.0
        %1142 = vmatprep.subr.mxu0 0.0
        %1143 = vmatpush1.msra.mxu0 0.0
        %1144 = vmatprep.subr.mxu0 0.0
        %1145 = vmatpush1.msra.mxu0 0.0
        %1146 = vmatprep.subr.mxu0 0.0
        %1147 = vmatpush1.msra.mxu0 0.0
        %1148 = vmatprep.subr.mxu0 0.0
        %1149 = vmatpush1.msra.mxu0 0.0
        %1150 = vmatprep.subr.mxu0 0.0
        %1151 = vmatpush1.msra.mxu0 0.0
        %1152 = vmatprep.subr.mxu0 0.0
        %1153 = vmatpush1.msra.mxu0 0.0
        %1154 = vmatprep.subr.mxu0 0.0
        %1155 = vmatpush1.msra.mxu0 0.0
        %1156 = vmatprep.subr.mxu0 0.0
        %1157 = vmatpush1.msra.mxu0 0.0
        %1158 = vmatprep.subr.mxu0 0.0
        %1159 = vmatpush1.msra.mxu0 0.0
        %1160 = vmatprep.subr.mxu0 0.0
        %1161 = vmatpush1.msra.mxu0 0.0
        %1162 = vmatprep.subr.mxu0 0.0
        %1163 = vmatpush1.msra.mxu0 0.0
        %1164 = vmatprep.subr.mxu0 0.0
        %1165 = vmatpush1.msra.mxu0 0.0
        %1166 = vmatprep.subr.mxu0 0.0
        %1167 = vmatpush1.msra.mxu0 0.0
        %1168 = vmatprep.subr.mxu0 0.0
        %1169 = vmatpush1.msra.mxu0 0.0
        %1170 = vmatprep.mubr.f32.mxu0 0.0
        %1171 = vmatmul.mubr.f32.gmra.mrb[0].mxu0 %v1100
        %v1172 = vpop.f32.mrb[0].mxu0
        %v1173 = vadd.f32 %v1083, %v1172
        %v1174 = vpop.f32.mrb[0].mxu0
        %v1175 = vadd.f32 %v1085, %v1174
        %1176 = vdwg.mxu0
        %v1177 = vld [vmem:[#allocation2] sm:$0xff]
        %v1178 = vld [vmem:[#allocation2 + $0x8] sm:$0xf]
        %s1179 = scalar_lea.vmem [#allocation18], 4
        %v1180 = vld [vmem:[%s1179] sm:$0x3]
        %v1182 = vlaneseq
        %v1183 = vshrl.u32 %v1182, 7
        %v1184 = vsub.s32 0, %v1183
        %v1185 = vrot.slane %v1180, %v1184
        %v1186 = vlaneseq
        %v1187 = vshrl.u32 %v1186, 7
        %v1188 = vsub.s32 1, %v1187
        %v1189 = vrot.slane %v1180, %v1188
        %v1190 = vcombine.low %v1185, %v1189
        %1191 = vrot.lane.b32.xlu0 %v1190, 113
        %v1192 = vpop.permute.xlu0 %1191
        %v1193 = vrot.slane %v1192, 4
        %vm1194 = vcmask 924672
        %v1195 = vsel %vm1194, %v1193, %v1192
        %v1198 = vmul.f32 %v1177, %v1195
        %v1199 = vmul.f32 %v1178, %v1193
        %s1200 = scalar_lea.vmem [#allocation12], 8
        %v1201 = vld [vmem:[%s1200] sm:$0xf]
        %v1204 = vcombine.high %v1198, %v1198
        %1205 = vrot.lane.b32.xlu0 %v1198, 15
        %v1206 = vpop.permute.xlu0 %1205
        %1207 = vrot.lane.b32.xlu0 %v1204, 15
        %v1208 = vpop.permute.xlu0 %1207
        %1209 = vrot.lane.b32.xlu0 %v1199, 15
        %v1210 = vpop.permute.xlu0 %1209
        %vm1211 = vcmask 121856
        %v1212 = vsel %vm1211, %v1206, %v1208
        %v1213 = vsel %vm1211, %v1208, %v1210
        %v1215 = vsel %vm1008, %v1201, 0
        %v1217 = vsel %vm631, %v1212, 0
        %v1219 = vsel %vm631, %v1213, 0
        %1221 = vmatprep.subr.mxu0 %v1219
        %1222 = vmatpush1.msra.mxu0 %v1217
        %1223 = vmatprep.subr.mxu0 0.0
        %1224 = vmatpush1.msra.mxu0 0.0
        %1225 = vmatprep.subr.mxu0 0.0
        %1226 = vmatpush1.msra.mxu0 0.0
        %1227 = vmatprep.subr.mxu0 0.0
        %1228 = vmatpush1.msra.mxu0 0.0
        %1229 = vmatprep.subr.mxu0 0.0
        %1230 = vmatpush1.msra.mxu0 0.0
        %1231 = vmatprep.subr.mxu0 0.0
        %1232 = vmatpush1.msra.mxu0 0.0
        %1233 = vmatprep.subr.mxu0 0.0
        %1234 = vmatpush1.msra.mxu0 0.0
        %1235 = vmatprep.subr.mxu0 0.0
        %1236 = vmatpush1.msra.mxu0 0.0
        %1237 = vmatprep.subr.mxu0 0.0
        %1238 = vmatpush1.msra.mxu0 0.0
        %1239 = vmatprep.subr.mxu0 0.0
        %1240 = vmatpush1.msra.mxu0 0.0
        %1241 = vmatprep.subr.mxu0 0.0
        %1242 = vmatpush1.msra.mxu0 0.0
        %1243 = vmatprep.subr.mxu0 0.0
        %1244 = vmatpush1.msra.mxu0 0.0
        %1245 = vmatprep.subr.mxu0 0.0
        %1246 = vmatpush1.msra.mxu0 0.0
        %1247 = vmatprep.subr.mxu0 0.0
        %1248 = vmatpush1.msra.mxu0 0.0
        %1249 = vmatprep.subr.mxu0 0.0
        %1250 = vmatpush1.msra.mxu0 0.0
        %1251 = vmatprep.subr.mxu0 0.0
        %1252 = vmatpush1.msra.mxu0 0.0
        %1253 = vmatprep.subr.mxu0 0.0
        %1254 = vmatpush1.msra.mxu0 0.0
        %1255 = vmatprep.subr.mxu0 0.0
        %1256 = vmatpush1.msra.mxu0 0.0
        %1257 = vmatprep.subr.mxu0 0.0
        %1258 = vmatpush1.msra.mxu0 0.0
        %1259 = vmatprep.subr.mxu0 0.0
        %1260 = vmatpush1.msra.mxu0 0.0
        %1261 = vmatprep.subr.mxu0 0.0
        %1262 = vmatpush1.msra.mxu0 0.0
        %1263 = vmatprep.subr.mxu0 0.0
        %1264 = vmatpush1.msra.mxu0 0.0
        %1265 = vmatprep.subr.mxu0 0.0
        %1266 = vmatpush1.msra.mxu0 0.0
        %1267 = vmatprep.subr.mxu0 0.0
        %1268 = vmatpush1.msra.mxu0 0.0
        %1269 = vmatprep.subr.mxu0 0.0
        %1270 = vmatpush1.msra.mxu0 0.0
        %1271 = vmatprep.subr.mxu0 0.0
        %1272 = vmatpush1.msra.mxu0 0.0
        %1273 = vmatprep.subr.mxu0 0.0
        %1274 = vmatpush1.msra.mxu0 0.0
        %1275 = vmatprep.subr.mxu0 0.0
        %1276 = vmatpush1.msra.mxu0 0.0
        %1277 = vmatprep.subr.mxu0 0.0
        %1278 = vmatpush1.msra.mxu0 0.0
        %1279 = vmatprep.subr.mxu0 0.0
        %1280 = vmatpush1.msra.mxu0 0.0
        %1281 = vmatprep.subr.mxu0 0.0
        %1282 = vmatpush1.msra.mxu0 0.0
        %1283 = vmatprep.subr.mxu0 0.0
        %1284 = vmatpush1.msra.mxu0 0.0
        %1285 = vmatprep.mubr.f32.mxu0 0.0
        %1286 = vmatmul.mubr.f32.gmra.mrb[0].mxu0 %v1215
        %v1287 = vpop.f32.mrb[0].mxu0
        %v1288 = vadd.f32 0.0, %v1287
        %v1289 = vpop.f32.mrb[0].mxu0
        %v1290 = vadd.f32 0.0, %v1289
        %1291 = vdwg.mxu0
        %v1292 = vadd.f32 %v1173, %v1288
        %v1293 = vadd.f32 %v1175, %v1290
        %v1294 = vld [vmem:[#allocation2] sm:$0xff]
        %v1295 = vld [vmem:[#allocation2 + $0x8] sm:$0xf]
        %s1296 = scalar_lea.vmem [#allocation18], 6
        %v1297 = vld [vmem:[%s1296] sm:$0x3]
        %v1299 = vlaneseq
        %v1300 = vshrl.u32 %v1299, 7
        %v1301 = vsub.s32 0, %v1300
        %v1302 = vrot.slane %v1297, %v1301
        %v1303 = vlaneseq
        %v1304 = vshrl.u32 %v1303, 7
        %v1305 = vsub.s32 1, %v1304
        %v1306 = vrot.slane %v1297, %v1305
        %v1307 = vcombine.low %v1302, %v1306
        %1308 = vrot.lane.b32.xlu0 %v1307, 127
        %v1309 = vpop.permute.xlu0 %1308
        %v1310 = vrot.slane %v1309, 4
        %vm1311 = vcmask 1039360
        %v1312 = vsel %vm1311, %v1310, %v1309
        %v1315 = vmul.f32 %v1294, %v1312
        %v1316 = vmul.f32 %v1295, %v1310
        %s1317 = scalar_lea.vmem [#allocation12], 12
        %v1318 = vld [vmem:[%s1317] sm:$0xf]
        %v1321 = vcombine.high %v1315, %v1315
        %1322 = vrot.lane.b32.xlu0 %v1315, 1
        %v1323 = vpop.permute.xlu0 %1322
        %1324 = vrot.lane.b32.xlu0 %v1321, 1
        %v1325 = vpop.permute.xlu0 %1324
        %1326 = vrot.lane.b32.xlu0 %v1316, 1
        %v1327 = vpop.permute.xlu0 %1326
        %vm1328 = vcmask 7168
        %v1329 = vsel %vm1328, %v1323, %v1325
        %v1330 = vsel %vm1328, %v1325, %v1327
        %v1332 = vsel %vm1008, %v1318, 0
        %v1334 = vsel %vm631, %v1329, 0
        %v1336 = vsel %vm631, %v1330, 0
        %1338 = vmatprep.subr.mxu0 %v1336
        %1339 = vmatpush1.msra.mxu0 %v1334
        %1340 = vmatprep.subr.mxu0 0.0
        %1341 = vmatpush1.msra.mxu0 0.0
        %1342 = vmatprep.subr.mxu0 0.0
        %1343 = vmatpush1.msra.mxu0 0.0
        %1344 = vmatprep.subr.mxu0 0.0
        %1345 = vmatpush1.msra.mxu0 0.0
        %1346 = vmatprep.subr.mxu0 0.0
        %1347 = vmatpush1.msra.mxu0 0.0
        %1348 = vmatprep.subr.mxu0 0.0
        %1349 = vmatpush1.msra.mxu0 0.0
        %1350 = vmatprep.subr.mxu0 0.0
        %1351 = vmatpush1.msra.mxu0 0.0
        %1352 = vmatprep.subr.mxu0 0.0
        %1353 = vmatpush1.msra.mxu0 0.0
        %1354 = vmatprep.subr.mxu0 0.0
        %1355 = vmatpush1.msra.mxu0 0.0
        %1356 = vmatprep.subr.mxu0 0.0
        %1357 = vmatpush1.msra.mxu0 0.0
        %1358 = vmatprep.subr.mxu0 0.0
        %1359 = vmatpush1.msra.mxu0 0.0
        %1360 = vmatprep.subr.mxu0 0.0
        %1361 = vmatpush1.msra.mxu0 0.0
        %1362 = vmatprep.subr.mxu0 0.0
        %1363 = vmatpush1.msra.mxu0 0.0
        %1364 = vmatprep.subr.mxu0 0.0
        %1365 = vmatpush1.msra.mxu0 0.0
        %1366 = vmatprep.subr.mxu0 0.0
        %1367 = vmatpush1.msra.mxu0 0.0
        %1368 = vmatprep.subr.mxu0 0.0
        %1369 = vmatpush1.msra.mxu0 0.0
        %1370 = vmatprep.subr.mxu0 0.0
        %1371 = vmatpush1.msra.mxu0 0.0
        %1372 = vmatprep.subr.mxu0 0.0
        %1373 = vmatpush1.msra.mxu0 0.0
        %1374 = vmatprep.subr.mxu0 0.0
        %1375 = vmatpush1.msra.mxu0 0.0
        %1376 = vmatprep.subr.mxu0 0.0
        %1377 = vmatpush1.msra.mxu0 0.0
        %1378 = vmatprep.subr.mxu0 0.0
        %1379 = vmatpush1.msra.mxu0 0.0
        %1380 = vmatprep.subr.mxu0 0.0
        %1381 = vmatpush1.msra.mxu0 0.0
        %1382 = vmatprep.subr.mxu0 0.0
        %1383 = vmatpush1.msra.mxu0 0.0
        %1384 = vmatprep.subr.mxu0 0.0
        %1385 = vmatpush1.msra.mxu0 0.0
        %1386 = vmatprep.subr.mxu0 0.0
        %1387 = vmatpush1.msra.mxu0 0.0
        %1388 = vmatprep.subr.mxu0 0.0
        %1389 = vmatpush1.msra.mxu0 0.0
        %1390 = vmatprep.subr.mxu0 0.0
        %1391 = vmatpush1.msra.mxu0 0.0
        %1392 = vmatprep.subr.mxu0 0.0
        %1393 = vmatpush1.msra.mxu0 0.0
        %1394 = vmatprep.subr.mxu0 0.0
        %1395 = vmatpush1.msra.mxu0 0.0
        %1396 = vmatprep.subr.mxu0 0.0
        %1397 = vmatpush1.msra.mxu0 0.0
        %1398 = vmatprep.subr.mxu0 0.0
        %1399 = vmatpush1.msra.mxu0 0.0
        %1400 = vmatprep.subr.mxu0 0.0
        %1401 = vmatpush1.msra.mxu0 0.0
        %1402 = vmatprep.mubr.f32.mxu0 0.0
        %1403 = vmatmul.mubr.f32.gmra.mrb[0].mxu0 %v1332
        %v1404 = vpop.f32.mrb[0].mxu0
        %v1405 = vadd.f32 0.0, %v1404
        %v1406 = vpop.f32.mrb[0].mxu0
        %v1407 = vadd.f32 0.0, %v1406
        %1408 = vdwg.mxu0
        %v1409 = vadd.f32 %v1292, %v1405
        %v1410 = vadd.f32 %v1293, %v1407
        %v1411 = vld [vmem:[#allocation2 + $0x4] sm:$0xff]
        %s1412 = scalar_lea.vmem [#allocation18], 8
        %v1413 = vld [vmem:[%s1412] sm:$0x3]
        %v1415 = vlaneseq
        %v1416 = vshrl.u32 %v1415, 7
        %v1417 = vsub.s32 0, %v1416
        %v1418 = vrot.slane %v1413, %v1417
        %v1419 = vlaneseq
        %v1420 = vshrl.u32 %v1419, 7
        %v1421 = vsub.s32 1, %v1420
        %v1422 = vrot.slane %v1413, %v1421
        %v1423 = vcombine.low %v1418, %v1422
        %v1425 = vmul.f32 %v1411, %v1423
        %s1426 = scalar_lea.vmem [#allocation12], 16
        %v1427 = vld [vmem:[%s1426] sm:$0xf]
        %v1429 = vcombine.high %v1425, %v1425
        %v1431 = vsel %vm1008, %v1427, 0
        %v1433 = vsel %vm631, %v1425, 0
        %v1435 = vsel %vm631, %v1429, 0
        %1437 = vmatprep.subr.mxu0 %v1435
        %1438 = vmatpush1.msra.mxu0 %v1433
        %1439 = vmatprep.subr.mxu0 0.0
        %1440 = vmatpush1.msra.mxu0 0.0
        %1441 = vmatprep.subr.mxu0 0.0
        %1442 = vmatpush1.msra.mxu0 0.0
        %1443 = vmatprep.subr.mxu0 0.0
        %1444 = vmatpush1.msra.mxu0 0.0
        %1445 = vmatprep.subr.mxu0 0.0
        %1446 = vmatpush1.msra.mxu0 0.0
        %1447 = vmatprep.subr.mxu0 0.0
        %1448 = vmatpush1.msra.mxu0 0.0
        %1449 = vmatprep.subr.mxu0 0.0
        %1450 = vmatpush1.msra.mxu0 0.0
        %1451 = vmatprep.subr.mxu0 0.0
        %1452 = vmatpush1.msra.mxu0 0.0
        %1453 = vmatprep.subr.mxu0 0.0
        %1454 = vmatpush1.msra.mxu0 0.0
        %1455 = vmatprep.subr.mxu0 0.0
        %1456 = vmatpush1.msra.mxu0 0.0
        %1457 = vmatprep.subr.mxu0 0.0
        %1458 = vmatpush1.msra.mxu0 0.0
        %1459 = vmatprep.subr.mxu0 0.0
        %1460 = vmatpush1.msra.mxu0 0.0
        %1461 = vmatprep.subr.mxu0 0.0
        %1462 = vmatpush1.msra.mxu0 0.0
        %1463 = vmatprep.subr.mxu0 0.0
        %1464 = vmatpush1.msra.mxu0 0.0
        %1465 = vmatprep.subr.mxu0 0.0
        %1466 = vmatpush1.msra.mxu0 0.0
        %1467 = vmatprep.subr.mxu0 0.0
        %1468 = vmatpush1.msra.mxu0 0.0
        %1469 = vmatprep.subr.mxu0 0.0
        %1470 = vmatpush1.msra.mxu0 0.0
        %1471 = vmatprep.subr.mxu0 0.0
        %1472 = vmatpush1.msra.mxu0 0.0
        %1473 = vmatprep.subr.mxu0 0.0
        %1474 = vmatpush1.msra.mxu0 0.0
        %1475 = vmatprep.subr.mxu0 0.0
        %1476 = vmatpush1.msra.mxu0 0.0
        %1477 = vmatprep.subr.mxu0 0.0
        %1478 = vmatpush1.msra.mxu0 0.0
        %1479 = vmatprep.subr.mxu0 0.0
        %1480 = vmatpush1.msra.mxu0 0.0
        %1481 = vmatprep.subr.mxu0 0.0
        %1482 = vmatpush1.msra.mxu0 0.0
        %1483 = vmatprep.subr.mxu0 0.0
        %1484 = vmatpush1.msra.mxu0 0.0
        %1485 = vmatprep.subr.mxu0 0.0
        %1486 = vmatpush1.msra.mxu0 0.0
        %1487 = vmatprep.subr.mxu0 0.0
        %1488 = vmatpush1.msra.mxu0 0.0
        %1489 = vmatprep.subr.mxu0 0.0
        %1490 = vmatpush1.msra.mxu0 0.0
        %1491 = vmatprep.subr.mxu0 0.0
        %1492 = vmatpush1.msra.mxu0 0.0
        %1493 = vmatprep.subr.mxu0 0.0
        %1494 = vmatpush1.msra.mxu0 0.0
        %1495 = vmatprep.subr.mxu0 0.0
        %1496 = vmatpush1.msra.mxu0 0.0
        %1497 = vmatprep.subr.mxu0 0.0
        %1498 = vmatpush1.msra.mxu0 0.0
        %1499 = vmatprep.subr.mxu0 0.0
        %1500 = vmatpush1.msra.mxu0 0.0
        %1501 = vmatprep.mubr.f32.mxu0 0.0
        %1502 = vmatmul.mubr.f32.gmra.mrb[0].mxu0 %v1431
        %v1503 = vpop.f32.mrb[0].mxu0
        %v1504 = vadd.f32 0.0, %v1503
        %v1505 = vpop.f32.mrb[0].mxu0
        %v1506 = vadd.f32 0.0, %v1505
        %1507 = vdwg.mxu0
        %v1508 = vadd.f32 %v1409, %v1504
        %v1509 = vadd.f32 %v1410, %v1506
        %v1510 = vld [vmem:[#allocation2 + $0x4] sm:$0xff]
        %v1511 = vld [vmem:[#allocation2 + $0xc] sm:$0xf]
        %s1512 = scalar_lea.vmem [#allocation18], 10
        %v1513 = vld [vmem:[%s1512] sm:$0x3]
        %v1515 = vlaneseq
        %v1516 = vshrl.u32 %v1515, 7
        %v1517 = vsub.s32 0, %v1516
        %v1518 = vrot.slane %v1513, %v1517
        %v1519 = vlaneseq
        %v1520 = vshrl.u32 %v1519, 7
        %v1521 = vsub.s32 1, %v1520
        %v1522 = vrot.slane %v1513, %v1521
        %v1523 = vcombine.low %v1518, %v1522
        %1524 = vrot.lane.b32.xlu0 %v1523, 1
        %v1525 = vpop.permute.xlu0 %1524
        %v1526 = vrot.slane %v1525, 4
        %v1527 = vsel %vm1328, %v1526, %v1525
        %v1530 = vmul.f32 %v1510, %v1527
        %v1531 = vmul.f32 %v1511, %v1526
        %s1532 = scalar_lea.vmem [#allocation12], 20
        %v1533 = vld [vmem:[%s1532] sm:$0xf]
        %v1536 = vcombine.high %v1530, %v1530
        %1537 = vrot.lane.b32.xlu0 %v1530, 127
        %v1538 = vpop.permute.xlu0 %1537
        %1539 = vrot.lane.b32.xlu0 %v1536, 127
        %v1540 = vpop.permute.xlu0 %1539
        %1541 = vrot.lane.b32.xlu0 %v1531, 127
        %v1542 = vpop.permute.xlu0 %1541
        %v1543 = vsel %vm1311, %v1538, %v1540
        %v1544 = vsel %vm1311, %v1540, %v1542
        %v1546 = vsel %vm1008, %v1533, 0
        %v1548 = vsel %vm631, %v1543, 0
        %v1550 = vsel %vm631, %v1544, 0
        %1552 = vmatprep.subr.mxu0 %v1550
        %1553 = vmatpush1.msra.mxu0 %v1548
        %1554 = vmatprep.subr.mxu0 0.0
        %1555 = vmatpush1.msra.mxu0 0.0
        %1556 = vmatprep.subr.mxu0 0.0
        %1557 = vmatpush1.msra.mxu0 0.0
        %1558 = vmatprep.subr.mxu0 0.0
        %1559 = vmatpush1.msra.mxu0 0.0
        %1560 = vmatprep.subr.mxu0 0.0
        %1561 = vmatpush1.msra.mxu0 0.0
        %1562 = vmatprep.subr.mxu0 0.0
        %1563 = vmatpush1.msra.mxu0 0.0
        %1564 = vmatprep.subr.mxu0 0.0
        %1565 = vmatpush1.msra.mxu0 0.0
        %1566 = vmatprep.subr.mxu0 0.0
        %1567 = vmatpush1.msra.mxu0 0.0
        %1568 = vmatprep.subr.mxu0 0.0
        %1569 = vmatpush1.msra.mxu0 0.0
        %1570 = vmatprep.subr.mxu0 0.0
        %1571 = vmatpush1.msra.mxu0 0.0
        %1572 = vmatprep.subr.mxu0 0.0
        %1573 = vmatpush1.msra.mxu0 0.0
        %1574 = vmatprep.subr.mxu0 0.0
        %1575 = vmatpush1.msra.mxu0 0.0
        %1576 = vmatprep.subr.mxu0 0.0
        %1577 = vmatpush1.msra.mxu0 0.0
        %1578 = vmatprep.subr.mxu0 0.0
        %1579 = vmatpush1.msra.mxu0 0.0
        %1580 = vmatprep.subr.mxu0 0.0
        %1581 = vmatpush1.msra.mxu0 0.0
        %1582 = vmatprep.subr.mxu0 0.0
        %1583 = vmatpush1.msra.mxu0 0.0
        %1584 = vmatprep.subr.mxu0 0.0
        %1585 = vmatpush1.msra.mxu0 0.0
        %1586 = vmatprep.subr.mxu0 0.0
        %1587 = vmatpush1.msra.mxu0 0.0
        %1588 = vmatprep.subr.mxu0 0.0
        %1589 = vmatpush1.msra.mxu0 0.0
        %1590 = vmatprep.subr.mxu0 0.0
        %1591 = vmatpush1.msra.mxu0 0.0
        %1592 = vmatprep.subr.mxu0 0.0
        %1593 = vmatpush1.msra.mxu0 0.0
        %1594 = vmatprep.subr.mxu0 0.0
        %1595 = vmatpush1.msra.mxu0 0.0
        %1596 = vmatprep.subr.mxu0 0.0
        %1597 = vmatpush1.msra.mxu0 0.0
        %1598 = vmatprep.subr.mxu0 0.0
        %1599 = vmatpush1.msra.mxu0 0.0
        %1600 = vmatprep.subr.mxu0 0.0
        %1601 = vmatpush1.msra.mxu0 0.0
        %1602 = vmatprep.subr.mxu0 0.0
        %1603 = vmatpush1.msra.mxu0 0.0
        %1604 = vmatprep.subr.mxu0 0.0
        %1605 = vmatpush1.msra.mxu0 0.0
        %1606 = vmatprep.subr.mxu0 0.0
        %1607 = vmatpush1.msra.mxu0 0.0
        %1608 = vmatprep.subr.mxu0 0.0
        %1609 = vmatpush1.msra.mxu0 0.0
        %1610 = vmatprep.subr.mxu0 0.0
        %1611 = vmatpush1.msra.mxu0 0.0
        %1612 = vmatprep.subr.mxu0 0.0
        %1613 = vmatpush1.msra.mxu0 0.0
        %1614 = vmatprep.subr.mxu0 0.0
        %1615 = vmatpush1.msra.mxu0 0.0
        %1616 = vmatprep.mubr.f32.mxu0 0.0
        %1617 = vmatmul.mubr.f32.gmra.mrb[0].mxu0 %v1546
        %v1618 = vpop.f32.mrb[0].mxu0
        %v1619 = vadd.f32 0.0, %v1618
        %v1620 = vpop.f32.mrb[0].mxu0
        %v1621 = vadd.f32 0.0, %v1620
        %1622 = vdwg.mxu0
        %v1623 = vadd.f32 %v1508, %v1619
        %v1624 = vadd.f32 %v1509, %v1621
        %v1625 = vld [vmem:[#allocation2 + $0x4] sm:$0xff]
        %v1626 = vld [vmem:[#allocation2 + $0xc] sm:$0xf]
        %s1627 = scalar_lea.vmem [#allocation18], 12
        %v1628 = vld [vmem:[%s1627] sm:$0x3]
        %v1630 = vlaneseq
        %v1631 = vshrl.u32 %v1630, 7
        %v1632 = vsub.s32 0, %v1631
        %v1633 = vrot.slane %v1628, %v1632
        %v1634 = vlaneseq
        %v1635 = vshrl.u32 %v1634, 7
        %v1636 = vsub.s32 1, %v1635
        %v1637 = vrot.slane %v1628, %v1636
        %v1638 = vcombine.low %v1633, %v1637
        %1639 = vrot.lane.b32.xlu0 %v1638, 15
        %v1640 = vpop.permute.xlu0 %1639
        %v1641 = vrot.slane %v1640, 4
        %v1642 = vsel %vm1211, %v1641, %v1640
        %v1645 = vmul.f32 %v1625, %v1642
        %v1646 = vmul.f32 %v1626, %v1641
        %s1647 = scalar_lea.vmem [#allocation12], 24
        %v1648 = vld [vmem:[%s1647] sm:$0xf]
        %v1651 = vcombine.high %v1645, %v1645
        %1652 = vrot.lane.b32.xlu0 %v1645, 113
        %v1653 = vpop.permute.xlu0 %1652
        %1654 = vrot.lane.b32.xlu0 %v1651, 113
        %v1655 = vpop.permute.xlu0 %1654
        %1656 = vrot.lane.b32.xlu0 %v1646, 113
        %v1657 = vpop.permute.xlu0 %1656
        %v1658 = vsel %vm1194, %v1653, %v1655
        %v1659 = vsel %vm1194, %v1655, %v1657
        %v1661 = vsel %vm1008, %v1648, 0
        %v1663 = vsel %vm631, %v1658, 0
        %v1665 = vsel %vm631, %v1659, 0
        %1667 = vmatprep.subr.mxu0 %v1665
        %1668 = vmatpush1.msra.mxu0 %v1663
        %1669 = vmatprep.subr.mxu0 0.0
        %1670 = vmatpush1.msra.mxu0 0.0
        %1671 = vmatprep.subr.mxu0 0.0
        %1672 = vmatpush1.msra.mxu0 0.0
        %1673 = vmatprep.subr.mxu0 0.0
        %1674 = vmatpush1.msra.mxu0 0.0
        %1675 = vmatprep.subr.mxu0 0.0
        %1676 = vmatpush1.msra.mxu0 0.0
        %1677 = vmatprep.subr.mxu0 0.0
        %1678 = vmatpush1.msra.mxu0 0.0
        %1679 = vmatprep.subr.mxu0 0.0
        %1680 = vmatpush1.msra.mxu0 0.0
        %1681 = vmatprep.subr.mxu0 0.0
        %1682 = vmatpush1.msra.mxu0 0.0
        %1683 = vmatprep.subr.mxu0 0.0
        %1684 = vmatpush1.msra.mxu0 0.0
        %1685 = vmatprep.subr.mxu0 0.0
        %1686 = vmatpush1.msra.mxu0 0.0
        %1687 = vmatprep.subr.mxu0 0.0
        %1688 = vmatpush1.msra.mxu0 0.0
        %1689 = vmatprep.subr.mxu0 0.0
        %1690 = vmatpush1.msra.mxu0 0.0
        %1691 = vmatprep.subr.mxu0 0.0
        %1692 = vmatpush1.msra.mxu0 0.0
        %1693 = vmatprep.subr.mxu0 0.0
        %1694 = vmatpush1.msra.mxu0 0.0
        %1695 = vmatprep.subr.mxu0 0.0
        %1696 = vmatpush1.msra.mxu0 0.0
        %1697 = vmatprep.subr.mxu0 0.0
        %1698 = vmatpush1.msra.mxu0 0.0
        %1699 = vmatprep.subr.mxu0 0.0
        %1700 = vmatpush1.msra.mxu0 0.0
        %1701 = vmatprep.subr.mxu0 0.0
        %1702 = vmatpush1.msra.mxu0 0.0
        %1703 = vmatprep.subr.mxu0 0.0
        %1704 = vmatpush1.msra.mxu0 0.0
        %1705 = vmatprep.subr.mxu0 0.0
        %1706 = vmatpush1.msra.mxu0 0.0
        %1707 = vmatprep.subr.mxu0 0.0
        %1708 = vmatpush1.msra.mxu0 0.0
        %1709 = vmatprep.subr.mxu0 0.0
        %1710 = vmatpush1.msra.mxu0 0.0
        %1711 = vmatprep.subr.mxu0 0.0
        %1712 = vmatpush1.msra.mxu0 0.0
        %1713 = vmatprep.subr.mxu0 0.0
        %1714 = vmatpush1.msra.mxu0 0.0
        %1715 = vmatprep.subr.mxu0 0.0
        %1716 = vmatpush1.msra.mxu0 0.0
        %1717 = vmatprep.subr.mxu0 0.0
        %1718 = vmatpush1.msra.mxu0 0.0
        %1719 = vmatprep.subr.mxu0 0.0
        %1720 = vmatpush1.msra.mxu0 0.0
        %1721 = vmatprep.subr.mxu0 0.0
        %1722 = vmatpush1.msra.mxu0 0.0
        %1723 = vmatprep.subr.mxu0 0.0
        %1724 = vmatpush1.msra.mxu0 0.0
        %1725 = vmatprep.subr.mxu0 0.0
        %1726 = vmatpush1.msra.mxu0 0.0
        %1727 = vmatprep.subr.mxu0 0.0
        %1728 = vmatpush1.msra.mxu0 0.0
        %1729 = vmatprep.subr.mxu0 0.0
        %1730 = vmatpush1.msra.mxu0 0.0
        %1731 = vmatprep.mubr.f32.mxu0 0.0
        %1732 = vmatmul.mubr.f32.gmra.mrb[0].mxu0 %v1661
        %v1733 = vpop.f32.mrb[0].mxu0
        %v1734 = vadd.f32 0.0, %v1733
        %v1735 = vpop.f32.mrb[0].mxu0
        %v1736 = vadd.f32 0.0, %v1735
        %1737 = vdwg.mxu0
        %v1738 = vadd.f32 %v1623, %v1734
        %v1739 = vadd.f32 %v1624, %v1736
        %v1740 = vld [vmem:[#allocation2 + $0x4] sm:$0xff]
        %v1741 = vld [vmem:[#allocation2 + $0xc] sm:$0xf]
        %s1742 = scalar_lea.vmem [#allocation18], 14
        %v1743 = vld [vmem:[%s1742] sm:$0x3]
        %v1745 = vlaneseq
        %v1746 = vshrl.u32 %v1745, 7
        %v1747 = vsub.s32 0, %v1746
        %v1748 = vrot.slane %v1743, %v1747
        %v1749 = vlaneseq
        %v1750 = vshrl.u32 %v1749, 7
        %v1751 = vsub.s32 1, %v1750
        %v1752 = vrot.slane %v1743, %v1751
        %v1753 = vcombine.low %v1748, %v1752
        %1754 = vrot.lane.b32.xlu0 %v1753, 16
        %v1755 = vpop.permute.xlu0 %1754
        %v1756 = vrot.slane %v1755, 4
        %v1757 = vsel %vm719, %v1756, %v1755
        %v1760 = vmul.f32 %v1740, %v1757
        %v1761 = vmul.f32 %v1741, %v1756
        %s1762 = scalar_lea.vmem [#allocation12], 28
        %v1763 = vld [vmem:[%s1762] sm:$0xf]
        %v1766 = vcombine.high %v1760, %v1760
        %1767 = vrot.lane.b32.xlu0 %v1760, 112
        %v1768 = vpop.permute.xlu0 %1767
        %1769 = vrot.lane.b32.xlu0 %v1766, 112
        %v1770 = vpop.permute.xlu0 %1769
        %1771 = vrot.lane.b32.xlu0 %v1761, 112
        %v1772 = vpop.permute.xlu0 %1771
        %v1773 = vsel %vm989, %v1768, %v1770
        %v1774 = vsel %vm989, %v1770, %v1772
        %v1776 = vsel %vm1008, %v1763, 0
        %v1778 = vsel %vm631, %v1773, 0
        %v1780 = vsel %vm631, %v1774, 0
        %1782 = vmatprep.subr.mxu0 %v1780
        %1783 = vmatpush1.msra.mxu0 %v1778
        %1784 = vmatprep.subr.mxu0 0.0
        %1785 = vmatpush1.msra.mxu0 0.0
        %1786 = vmatprep.subr.mxu0 0.0
        %1787 = vmatpush1.msra.mxu0 0.0
        %1788 = vmatprep.subr.mxu0 0.0
        %1789 = vmatpush1.msra.mxu0 0.0
        %1790 = vmatprep.subr.mxu0 0.0
        %1791 = vmatpush1.msra.mxu0 0.0
        %1792 = vmatprep.subr.mxu0 0.0
        %1793 = vmatpush1.msra.mxu0 0.0
        %1794 = vmatprep.subr.mxu0 0.0
        %1795 = vmatpush1.msra.mxu0 0.0
        %1796 = vmatprep.subr.mxu0 0.0
        %1797 = vmatpush1.msra.mxu0 0.0
        %1798 = vmatprep.subr.mxu0 0.0
        %1799 = vmatpush1.msra.mxu0 0.0
        %1800 = vmatprep.subr.mxu0 0.0
        %1801 = vmatpush1.msra.mxu0 0.0
        %1802 = vmatprep.subr.mxu0 0.0
        %1803 = vmatpush1.msra.mxu0 0.0
        %1804 = vmatprep.subr.mxu0 0.0
        %1805 = vmatpush1.msra.mxu0 0.0
        %1806 = vmatprep.subr.mxu0 0.0
        %1807 = vmatpush1.msra.mxu0 0.0
        %1808 = vmatprep.subr.mxu0 0.0
        %1809 = vmatpush1.msra.mxu0 0.0
        %1810 = vmatprep.subr.mxu0 0.0
        %1811 = vmatpush1.msra.mxu0 0.0
        %1812 = vmatprep.subr.mxu0 0.0
        %1813 = vmatpush1.msra.mxu0 0.0
        %1814 = vmatprep.subr.mxu0 0.0
        %1815 = vmatpush1.msra.mxu0 0.0
        %1816 = vmatprep.subr.mxu0 0.0
        %1817 = vmatpush1.msra.mxu0 0.0
        %1818 = vmatprep.subr.mxu0 0.0
        %1819 = vmatpush1.msra.mxu0 0.0
        %1820 = vmatprep.subr.mxu0 0.0
        %1821 = vmatpush1.msra.mxu0 0.0
        %1822 = vmatprep.subr.mxu0 0.0
        %1823 = vmatpush1.msra.mxu0 0.0
        %1824 = vmatprep.subr.mxu0 0.0
        %1825 = vmatpush1.msra.mxu0 0.0
        %1826 = vmatprep.subr.mxu0 0.0
        %1827 = vmatpush1.msra.mxu0 0.0
        %1828 = vmatprep.subr.mxu0 0.0
        %1829 = vmatpush1.msra.mxu0 0.0
        %1830 = vmatprep.subr.mxu0 0.0
        %1831 = vmatpush1.msra.mxu0 0.0
        %1832 = vmatprep.subr.mxu0 0.0
        %1833 = vmatpush1.msra.mxu0 0.0
        %1834 = vmatprep.subr.mxu0 0.0
        %1835 = vmatpush1.msra.mxu0 0.0
        %1836 = vmatprep.subr.mxu0 0.0
        %1837 = vmatpush1.msra.mxu0 0.0
        %1838 = vmatprep.subr.mxu0 0.0
        %1839 = vmatpush1.msra.mxu0 0.0
        %1840 = vmatprep.subr.mxu0 0.0
        %1841 = vmatpush1.msra.mxu0 0.0
        %1842 = vmatprep.subr.mxu0 0.0
        %1843 = vmatpush1.msra.mxu0 0.0
        %1844 = vmatprep.subr.mxu0 0.0
        %1845 = vmatpush1.msra.mxu0 0.0
        %1846 = vmatprep.mubr.f32.mxu0 0.0
        %1847 = vmatmul.mubr.f32.gmra.mrb[0].mxu0 %v1776
        %v1848 = vpop.f32.mrb[0].mxu0
        %v1849 = vadd.f32 0.0, %v1848
        %v1850 = vpop.f32.mrb[0].mxu0
        %v1851 = vadd.f32 0.0, %v1850
        %1852 = vdwg.mxu0
        %v1853 = vadd.f32 %v1738, %v1849
        %v1854 = vadd.f32 %v1739, %v1851
        %v1855 = vld [vmem:[#allocation2 + $0x4] sm:$0xff]
        %v1856 = vld [vmem:[#allocation2 + $0xc] sm:$0xf]
        %s1857 = scalar_lea.vmem [#allocation18], 16
        %v1858 = vld [vmem:[%s1857] sm:$0x3]
        %v1860 = vlaneseq
        %v1861 = vshrl.u32 %v1860, 7
        %v1862 = vsub.s32 0, %v1861
        %v1863 = vrot.slane %v1858, %v1862
        %v1864 = vlaneseq
        %v1865 = vshrl.u32 %v1864, 7
        %v1866 = vsub.s32 1, %v1865
        %v1867 = vrot.slane %v1858, %v1866
        %v1868 = vcombine.low %v1863, %v1867
        %1869 = vrot.lane.b32.xlu0 %v1868, 17
        %v1870 = vpop.permute.xlu0 %1869
        %v1871 = vrot.slane %v1870, 4
        %v1872 = vsel %vm1096, %v1871, %v1870
        %v1875 = vmul.f32 %v1855, %v1872
        %v1876 = vmul.f32 %v1856, %v1871
        %s1877 = scalar_lea.vmem [#allocation12], 32
        %v1878 = vld [vmem:[%s1877] sm:$0xf]
        %v1881 = vcombine.high %v1875, %v1875
        %1882 = vrot.lane.b32.xlu0 %v1875, 111
        %v1883 = vpop.permute.xlu0 %1882
        %1884 = vrot.lane.b32.xlu0 %v1881, 111
        %v1885 = vpop.permute.xlu0 %1884
        %1886 = vrot.lane.b32.xlu0 %v1876, 111
        %v1887 = vpop.permute.xlu0 %1886
        %v1888 = vsel %vm967, %v1883, %v1885
        %v1889 = vsel %vm967, %v1885, %v1887
        %v1891 = vsel %vm1008, %v1878, 0
        %v1893 = vsel %vm631, %v1888, 0
        %v1895 = vsel %vm631, %v1889, 0
        %1897 = vmatprep.subr.mxu0 %v1895
        %1898 = vmatpush1.msra.mxu0 %v1893
        %1899 = vmatprep.subr.mxu0 0.0
        %1900 = vmatpush1.msra.mxu0 0.0
        %1901 = vmatprep.subr.mxu0 0.0
        %1902 = vmatpush1.msra.mxu0 0.0
        %1903 = vmatprep.subr.mxu0 0.0
        %1904 = vmatpush1.msra.mxu0 0.0
        %1905 = vmatprep.subr.mxu0 0.0
        %1906 = vmatpush1.msra.mxu0 0.0
        %1907 = vmatprep.subr.mxu0 0.0
        %1908 = vmatpush1.msra.mxu0 0.0
        %1909 = vmatprep.subr.mxu0 0.0
        %1910 = vmatpush1.msra.mxu0 0.0
        %1911 = vmatprep.subr.mxu0 0.0
        %1912 = vmatpush1.msra.mxu0 0.0
        %1913 = vmatprep.subr.mxu0 0.0
        %1914 = vmatpush1.msra.mxu0 0.0
        %1915 = vmatprep.subr.mxu0 0.0
        %1916 = vmatpush1.msra.mxu0 0.0
        %1917 = vmatprep.subr.mxu0 0.0
        %1918 = vmatpush1.msra.mxu0 0.0
        %1919 = vmatprep.subr.mxu0 0.0
        %1920 = vmatpush1.msra.mxu0 0.0
        %1921 = vmatprep.subr.mxu0 0.0
        %1922 = vmatpush1.msra.mxu0 0.0
        %1923 = vmatprep.subr.mxu0 0.0
        %1924 = vmatpush1.msra.mxu0 0.0
        %1925 = vmatprep.subr.mxu0 0.0
        %1926 = vmatpush1.msra.mxu0 0.0
        %1927 = vmatprep.subr.mxu0 0.0
        %1928 = vmatpush1.msra.mxu0 0.0
        %1929 = vmatprep.subr.mxu0 0.0
        %1930 = vmatpush1.msra.mxu0 0.0
        %1931 = vmatprep.subr.mxu0 0.0
        %1932 = vmatpush1.msra.mxu0 0.0
        %1933 = vmatprep.subr.mxu0 0.0
        %1934 = vmatpush1.msra.mxu0 0.0
        %1935 = vmatprep.subr.mxu0 0.0
        %1936 = vmatpush1.msra.mxu0 0.0
        %1937 = vmatprep.subr.mxu0 0.0
        %1938 = vmatpush1.msra.mxu0 0.0
        %1939 = vmatprep.subr.mxu0 0.0
        %1940 = vmatpush1.msra.mxu0 0.0
        %1941 = vmatprep.subr.mxu0 0.0
        %1942 = vmatpush1.msra.mxu0 0.0
        %1943 = vmatprep.subr.mxu0 0.0
        %1944 = vmatpush1.msra.mxu0 0.0
        %1945 = vmatprep.subr.mxu0 0.0
        %1946 = vmatpush1.msra.mxu0 0.0
        %1947 = vmatprep.subr.mxu0 0.0
        %1948 = vmatpush1.msra.mxu0 0.0
        %1949 = vmatprep.subr.mxu0 0.0
        %1950 = vmatpush1.msra.mxu0 0.0
        %1951 = vmatprep.subr.mxu0 0.0
        %1952 = vmatpush1.msra.mxu0 0.0
        %1953 = vmatprep.subr.mxu0 0.0
        %1954 = vmatpush1.msra.mxu0 0.0
        %1955 = vmatprep.subr.mxu0 0.0
        %1956 = vmatpush1.msra.mxu0 0.0
        %1957 = vmatprep.subr.mxu0 0.0
        %1958 = vmatpush1.msra.mxu0 0.0
        %1959 = vmatprep.subr.mxu0 0.0
        %1960 = vmatpush1.msra.mxu0 0.0
        %1961 = vmatprep.mubr.f32.mxu0 0.0
        %1962 = vmatmul.mubr.f32.gmra.mrb[0].mxu0 %v1891
        %v1963 = vpop.f32.mrb[0].mxu0
        %v1964 = vadd.f32 0.0, %v1963
        %v1965 = vpop.f32.mrb[0].mxu0
        %v1966 = vadd.f32 0.0, %v1965
        %1967 = vdwg.mxu0
        %v1968 = vadd.f32 %v1853, %v1964
        %v1969 = vadd.f32 %v1854, %v1966
        %v1970 = vld [vmem:[#allocation14] sm:$0xf]
        %1972 = vset.pattern.permute.xlu0 0
        %1973 = vperm.xlu0 %1972, %v1970
        %v1974 = vpop.permute.xlu0 %1973
        %v1976 = vadd.f32 %v1968, %v1974
        %v1977 = vadd.f32 %v1969, %v1974
        %v1978 = vld [vmem:[%s503] sm:$0xf]
        %v1979 = vld [vmem:[%s512] sm:$0xf]
        %v1980 = vsel %vm631, %v1976, 0.0
        %v1981 = vsel %vm631, %v1977, 0.0
        %v1982 = vadd.f32 %v1980, %v1981
        %1983 = vadd.xlane.f32.xlu0 %v1982
        %v1984 = vpop.xlane.xlu0 %1983
        %v1985 = vmul.f32 %v1984, %v637
        %v1986 = vsel %vm631, %v1985, 0.0
        %v1987 = vrot.slane %v1986, 4
        %v1988 = vadd.f32 %v1986, %v1987
        %v1989 = vrot.slane %v1988, 2
        %v1990 = vadd.f32 %v1988, %v1989
        %v1991 = vrot.slane %v1990, 1
        %v1992 = vadd.f32 %v1990, %v1991
        %v1993 = vmul.f32 %v1992, %v646
        %1994 = vmatprep.subr.mxu0 0.0
        %1995 = vmatpush1.msra.mxu0 %v590
        %1996 = vmatprep.subr.mxu0 0.0
        %1997 = vmatpush1.msra.mxu0 %v591
        %1998 = vmatprep.subr.mxu0 0.0
        %1999 = vmatpush1.msra.mxu0 %v592
        %2000 = vmatprep.subr.mxu0 0.0
        %2001 = vmatpush1.msra.mxu0 %v593
        %2002 = vmatprep.subr.mxu0 0.0
        %2003 = vmatpush1.msra.mxu0 %v594
        %2004 = vmatprep.subr.mxu0 0.0
        %2005 = vmatpush1.msra.mxu0 %v595
        %2006 = vmatprep.subr.mxu0 0.0
        %2007 = vmatpush1.msra.mxu0 %v596
        %2008 = vmatprep.subr.mxu0 0.0
        %2009 = vmatpush1.msra.mxu0 %v597
        %2010 = vmatprep.subr.mxu0 0.0
        %2011 = vmatpush1.msra.mxu0 %v598
        %2012 = vmatprep.subr.mxu0 0.0
        %2013 = vmatpush1.msra.mxu0 %v599
        %2014 = vmatprep.subr.mxu0 0.0
        %2015 = vmatpush1.msra.mxu0 %v600
        %2016 = vmatprep.subr.mxu0 0.0
        %2017 = vmatpush1.msra.mxu0 %v601
        %2018 = vmatprep.subr.mxu0 0.0
        %2019 = vmatpush1.msra.mxu0 %v602
        %2020 = vmatprep.subr.mxu0 0.0
        %2021 = vmatpush1.msra.mxu0 %v603
        %2022 = vmatprep.subr.mxu0 0.0
        %2023 = vmatpush1.msra.mxu0 %v604
        %2024 = vmatprep.subr.mxu0 0.0
        %2025 = vmatpush1.msra.mxu0 %v605
        %2026 = vmatprep.subr.mxu0 0.0
        %2027 = vmatpush1.msra.mxu0 %v606
        %2028 = vmatprep.subr.mxu0 0.0
        %2029 = vmatpush1.msra.mxu0 %v607
        %2030 = vmatprep.subr.mxu0 0.0
        %2031 = vmatpush1.msra.mxu0 %v608
        %2032 = vmatprep.subr.mxu0 0.0
        %2033 = vmatpush1.msra.mxu0 %v609
        %2034 = vmatprep.subr.mxu0 0.0
        %2035 = vmatpush1.msra.mxu0 %v610
        %2036 = vmatprep.subr.mxu0 0.0
        %2037 = vmatpush1.msra.mxu0 %v611
        %2038 = vmatprep.subr.mxu0 0.0
        %2039 = vmatpush1.msra.mxu0 %v612
        %2040 = vmatprep.subr.mxu0 0.0
        %2041 = vmatpush1.msra.mxu0 %v613
        %2042 = vmatprep.subr.mxu0 0.0
        %2043 = vmatpush1.msra.mxu0 %v614
        %2044 = vmatprep.subr.mxu0 0.0
        %2045 = vmatpush1.msra.mxu0 %v615
        %2046 = vmatprep.subr.mxu0 0.0
        %2047 = vmatpush1.msra.mxu0 %v616
        %2048 = vmatprep.subr.mxu0 0.0
        %2049 = vmatpush1.msra.mxu0 %v617
        %2050 = vmatprep.subr.mxu0 0.0
        %2051 = vmatpush1.msra.mxu0 %v618
        %2052 = vmatprep.subr.mxu0 0.0
        %2053 = vmatpush1.msra.mxu0 %v619
        %2054 = vmatprep.subr.mxu0 0.0
        %2055 = vmatpush1.msra.mxu0 %v620
        %2056 = vmatprep.subr.mxu0 0.0
        %2057 = vmatpush1.msra.mxu0 %v621
        %2058 = vmatprep.mubr.f32.mxu0 %v1977
        %2059 = vmatmul.mubr.f32.gmra.mrb[0].mxu0 %v1976
        %v2060 = vpop.f32.mrb[0].mxu0
        %v2061 = vadd.f32 0.0, %v2060
        %v2062 = vpop.f32.mrb[0].mxu0
        %2063 = vdwg.mxu0
        %v2064 = vmul.f32 %v2061, 0.0625
        %v2066 = vsel %vm719, %v2064, 0
        %2068 = vmatprep.subr.mxu0 %v623
        %2069 = vmatpush1.msra.mxu0 %v622
        %2070 = vmatprep.subr.mxu0 %v625
        %2071 = vmatpush1.msra.mxu0 %v624
        %2072 = vmatprep.subr.mxu0 0.0
        %2073 = vmatpush1.msra.mxu0 0.0
        %2074 = vmatprep.subr.mxu0 0.0
        %2075 = vmatpush1.msra.mxu0 0.0
        %2076 = vmatprep.subr.mxu0 0.0
        %2077 = vmatpush1.msra.mxu0 0.0
        %2078 = vmatprep.subr.mxu0 0.0
        %2079 = vmatpush1.msra.mxu0 0.0
        %2080 = vmatprep.subr.mxu0 0.0
        %2081 = vmatpush1.msra.mxu0 0.0
        %2082 = vmatprep.subr.mxu0 0.0
        %2083 = vmatpush1.msra.mxu0 0.0
        %2084 = vmatprep.subr.mxu0 0.0
        %2085 = vmatpush1.msra.mxu0 0.0
        %2086 = vmatprep.subr.mxu0 0.0
        %2087 = vmatpush1.msra.mxu0 0.0
        %2088 = vmatprep.subr.mxu0 0.0
        %2089 = vmatpush1.msra.mxu0 0.0
        %2090 = vmatprep.subr.mxu0 0.0
        %2091 = vmatpush1.msra.mxu0 0.0
        %2092 = vmatprep.subr.mxu0 0.0
        %2093 = vmatpush1.msra.mxu0 0.0
        %2094 = vmatprep.subr.mxu0 0.0
        %2095 = vmatpush1.msra.mxu0 0.0
        %2096 = vmatprep.subr.mxu0 0.0
        %2097 = vmatpush1.msra.mxu0 0.0
        %2098 = vmatprep.subr.mxu0 0.0
        %2099 = vmatpush1.msra.mxu0 0.0
        %2100 = vmatprep.subr.mxu0 0.0
        %2101 = vmatpush1.msra.mxu0 0.0
        %2102 = vmatprep.subr.mxu0 0.0
        %2103 = vmatpush1.msra.mxu0 0.0
        %2104 = vmatprep.subr.mxu0 0.0
        %2105 = vmatpush1.msra.mxu0 0.0
        %2106 = vmatprep.subr.mxu0 0.0
        %2107 = vmatpush1.msra.mxu0 0.0
        %2108 = vmatprep.subr.mxu0 0.0
        %2109 = vmatpush1.msra.mxu0 0.0
        %2110 = vmatprep.subr.mxu0 0.0
        %2111 = vmatpush1.msra.mxu0 0.0
        %2112 = vmatprep.subr.mxu0 0.0
        %2113 = vmatpush1.msra.mxu0 0.0
        %2114 = vmatprep.subr.mxu0 0.0
        %2115 = vmatpush1.msra.mxu0 0.0
        %2116 = vmatprep.subr.mxu0 0.0
        %2117 = vmatpush1.msra.mxu0 0.0
        %2118 = vmatprep.subr.mxu0 0.0
        %2119 = vmatpush1.msra.mxu0 0.0
        %2120 = vmatprep.subr.mxu0 0.0
        %2121 = vmatpush1.msra.mxu0 0.0
        %2122 = vmatprep.subr.mxu0 0.0
        %2123 = vmatpush1.msra.mxu0 0.0
        %2124 = vmatprep.subr.mxu0 0.0
        %2125 = vmatpush1.msra.mxu0 0.0
        %2126 = vmatprep.subr.mxu0 0.0
        %2127 = vmatpush1.msra.mxu0 0.0
        %2128 = vmatprep.subr.mxu0 0.0
        %2129 = vmatpush1.msra.mxu0 0.0
        %2130 = vmatprep.subr.mxu0 0.0
        %2131 = vmatpush1.msra.mxu0 0.0
        %2132 = vmatprep.mubr.f32.mxu0 0.0
        %2133 = vmatmul.mubr.f32.gmra.mrb[0].mxu0 %v2066
        %v2134 = vpop.f32.mrb[0].mxu0
        %v2135 = vadd.f32 0.0, %v2134
        %v2136 = vpop.f32.mrb[0].mxu0
        %v2137 = vadd.f32 0.0, %v2136
        %2138 = vdwg.mxu0
        %v2139 = vsub.f32 %v1976, %v2135
        %v2140 = vsub.f32 %v1977, %v2137
        %v2141 = vmul.f32 %v2139, %v2139
        %v2142 = vmul.f32 %v2140, %v2140
        %2143 = vmatprep.subr.mxu0 0.0
        %2144 = vmatpush1.msra.mxu0 %v590
        %2145 = vmatprep.subr.mxu0 0.0
        %2146 = vmatpush1.msra.mxu0 %v591
        %2147 = vmatprep.subr.mxu0 0.0
        %2148 = vmatpush1.msra.mxu0 %v592
        %2149 = vmatprep.subr.mxu0 0.0
        %2150 = vmatpush1.msra.mxu0 %v593
        %2151 = vmatprep.subr.mxu0 0.0
        %2152 = vmatpush1.msra.mxu0 %v594
        %2153 = vmatprep.subr.mxu0 0.0
        %2154 = vmatpush1.msra.mxu0 %v595
        %2155 = vmatprep.subr.mxu0 0.0
        %2156 = vmatpush1.msra.mxu0 %v596
        %2157 = vmatprep.subr.mxu0 0.0
        %2158 = vmatpush1.msra.mxu0 %v597
        %2159 = vmatprep.subr.mxu0 0.0
        %2160 = vmatpush1.msra.mxu0 %v598
        %2161 = vmatprep.subr.mxu0 0.0
        %2162 = vmatpush1.msra.mxu0 %v599
        %2163 = vmatprep.subr.mxu0 0.0
        %2164 = vmatpush1.msra.mxu0 %v600
        %2165 = vmatprep.subr.mxu0 0.0
        %2166 = vmatpush1.msra.mxu0 %v601
        %2167 = vmatprep.subr.mxu0 0.0
        %2168 = vmatpush1.msra.mxu0 %v602
        %2169 = vmatprep.subr.mxu0 0.0
        %2170 = vmatpush1.msra.mxu0 %v603
        %2171 = vmatprep.subr.mxu0 0.0
        %2172 = vmatpush1.msra.mxu0 %v604
        %2173 = vmatprep.subr.mxu0 0.0
        %2174 = vmatpush1.msra.mxu0 %v605
        %2175 = vmatprep.subr.mxu0 0.0
        %2176 = vmatpush1.msra.mxu0 %v606
        %2177 = vmatprep.subr.mxu0 0.0
        %2178 = vmatpush1.msra.mxu0 %v607
        %2179 = vmatprep.subr.mxu0 0.0
        %2180 = vmatpush1.msra.mxu0 %v608
        %2181 = vmatprep.subr.mxu0 0.0
        %2182 = vmatpush1.msra.mxu0 %v609
        %2183 = vmatprep.subr.mxu0 0.0
        %2184 = vmatpush1.msra.mxu0 %v610
        %2185 = vmatprep.subr.mxu0 0.0
        %2186 = vmatpush1.msra.mxu0 %v611
        %2187 = vmatprep.subr.mxu0 0.0
        %2188 = vmatpush1.msra.mxu0 %v612
        %2189 = vmatprep.subr.mxu0 0.0
        %2190 = vmatpush1.msra.mxu0 %v613
        %2191 = vmatprep.subr.mxu0 0.0
        %2192 = vmatpush1.msra.mxu0 %v614
        %2193 = vmatprep.subr.mxu0 0.0
        %2194 = vmatpush1.msra.mxu0 %v615
        %2195 = vmatprep.subr.mxu0 0.0
        %2196 = vmatpush1.msra.mxu0 %v616
        %2197 = vmatprep.subr.mxu0 0.0
        %2198 = vmatpush1.msra.mxu0 %v617
        %2199 = vmatprep.subr.mxu0 0.0
        %2200 = vmatpush1.msra.mxu0 %v618
        %2201 = vmatprep.subr.mxu0 0.0
        %2202 = vmatpush1.msra.mxu0 %v619
        %2203 = vmatprep.subr.mxu0 0.0
        %2204 = vmatpush1.msra.mxu0 %v620
        %2205 = vmatprep.subr.mxu0 0.0
        %2206 = vmatpush1.msra.mxu0 %v621
        %2207 = vmatprep.mubr.f32.mxu0 %v2142
        %2208 = vmatmul.mubr.f32.gmra.mrb[0].mxu0 %v2141
        %v2209 = vpop.f32.mrb[0].mxu0
        %v2210 = vadd.f32 0.0, %v2209
        %v2211 = vpop.f32.mrb[0].mxu0
        %2212 = vdwg.mxu0
        %v2213 = vmul.f32 %v2210, 0.06666667
        %v2214 = vrsqrt.pop %v2213
        %v2215 = vmul.f32 %v2213, %v2214
        %vm2216 = vcmp.eq.f32.partialorder %v2213, inf
        %v2217 = vsel %vm2216, %v2213, %v2215
        %vm2218 = vcmp.eq.f32.partialorder %v2213, 0.0
        %v2219 = vand.u32 %v2213, 2147483648
        %v2220 = vsel %vm2218, %v2219, %v2217
        %v2221 = vsel %vm881, %v2220, 0.0
        %2222 = vadd.xlane.f32.xlu0 %v2221
        %v2223 = vpop.xlane.xlu0 %2222
        %v2224 = vmul.f32 %v2223, %v885
        %v2225 = vsub.f32 %v2220, %v2224
        %v2226 = vmul.f32 %v2225, %v2225
        %v2227 = vsel %vm881, %v2226, 0.0
        %2228 = vadd.xlane.f32.xlu0 %v2227
        %v2229 = vpop.xlane.xlu0 %2228
        %v2230 = vmul.f32 %v2229, 0.06666667
        %v2231 = vrsqrt.pop %v2230
        %v2232 = vmul.f32 %v2230, %v2231
        %vm2233 = vcmp.eq.f32.partialorder %v2230, inf
        %v2234 = vsel %vm2233, %v2230, %v2232
        %vm2235 = vcmp.eq.f32.partialorder %v2230, 0.0
        %v2236 = vand.u32 %v2230, 2147483648
        %v2237 = vsel %vm2235, %v2236, %v2234
        %v2238 = vsel %vm631, %v2237, 0.0
        %v2239 = vrot.slane %v2238, 4
        %v2240 = vadd.f32 %v2238, %v2239
        %v2241 = vrot.slane %v2240, 2
        %v2242 = vadd.f32 %v2240, %v2241
        %v2243 = vrot.slane %v2242, 1
        %v2244 = vadd.f32 %v2242, %v2243
        %v2245 = vmul.f32 %v2244, %v646
        %v2246 = vsub.f32 %v2237, %v2245
        %v2247 = vmul.f32 %v2246, %v2246
        %v2248 = vsel %vm631, %v2247, 0.0
        %v2249 = vrot.slane %v2248, 4
        %v2250 = vadd.f32 %v2248, %v2249
        %v2251 = vrot.slane %v2250, 2
        %v2252 = vadd.f32 %v2250, %v2251
        %v2253 = vrot.slane %v2252, 1
        %v2254 = vadd.f32 %v2252, %v2253
        %v2255 = vmul.f32 %v2254, 0.33333334
        %v2256 = vadd.f32 %v2255, 1e-08
        %v2257 = vrsqrt.pop %v2256
        %v2258 = vsub.f32 %v1976, %v1993
        %v2259 = vsub.f32 %v1977, %v1993
        %v2260 = vmul.f32 %v2258, %v2257
        %v2261 = vmul.f32 %v2259, %v2257
        %2263 = vset.pattern.permute.xlu0 0
        %2264 = vperm.xlu0 %2263, %v1978
        %v2265 = vpop.permute.xlu0 %2264
        %v2267 = vmul.f32 %v2260, %v2265
        %v2268 = vmul.f32 %v2261, %v2265
        %2270 = vset.pattern.permute.xlu0 0
        %2271 = vperm.xlu0 %2270, %v1979
        %v2272 = vpop.permute.xlu0 %2271
        %v2274 = vadd.f32 %v2267, %v2272
        %v2275 = vadd.f32 %v2268, %v2272
        %v2278 = vcombine.low %v2274, %v2275
        %2280 = vst [vmem:[%s588] sm:$0xff] %v2278
        %s2281 = sand.u32 %s279, 1
        %s2282 = scalar_lea.sflag [#allocation5], %s2281
        %s2283 = sand.u32 %s279, 1
        %s2284 = smul.addr %s2283, 8
        %s2285 = scalar_lea.vmem [#allocation20], %s2284
        // Predicated region
        $region101: #{sequential_with_adain.1} parent=59 // pred_check
          %p2286 = pneg %p289
        $region102: #{sequential_with_adain.1} parent=59 // pred_check_branch
          %2288 = sbr.rel (%p2286) target = $region104
        $region103: #{sequential_with_adain.1} parent=59 // pred_region
          %s2290 = ssub.s32 128, 128
          %2291 = vsyncadd %s2282, %s2290
          %s2292 = smul.addr %s36, 2
          %s2293 = smul.addr %s2292, 64
          %s2294 = scalar_lea.hbm %s10, %s2293
          %s2296 = sshll.u32 %s2285, 4
          %s2297 = int_to_ptr.vmem [resolvable:$true] %s2296
          %2299 = dma.vmem_to_hbm [thread:$0]  %s2297, 128, %s2294, %s2282
        $region104: #{sequential_with_adain.1} parent=59 // pred_fallthru
          _
      $region60: #{sequential_with_adain.1} parent=5 // pred_fallthru
        _
      %p2300 = scmp.le.s32.totalorder 2, %s31
      // Predicated region
      $region105: #{sequential_with_adain.1} parent=5 // pred_check
        %p2301 = pneg %p2300
      $region106: #{sequential_with_adain.1} parent=5 // pred_check_branch
        %2303 = sbr.rel (%p2301) target = $region108
      $region107: #{sequential_with_adain.1} parent=5 // pred_region
        %s2304 = ssub.s32 %s31, 2
        // Predicated region
        $region109: #{sequential_with_adain.1} parent=107 // pred_check
          %p2305 = pneg %p295
        $region110: #{sequential_with_adain.1} parent=107 // pred_check_branch
          %2307 = sbr.rel (%p2305) target = $region112
        $region111: #{sequential_with_adain.1} parent=107 // pred_region
          %s2308 = sand.u32 %s280, 1
          %s2309 = scalar_lea.sflag [#allocation5], %s2308
          %s2310 = sand.u32 %s280, 1
          %s2311 = smul.addr %s2310, 8
          %s2312 = scalar_lea.vmem [#allocation20], %s2311
          %2313 = dma.done %s2309, 128
        $region112: #{sequential_with_adain.1} parent=107 // pred_fallthru
          _
      $region108: #{sequential_with_adain.1} parent=5 // pred_fallthru
        _
    $region6: #{sequential_with_adain.1} parent=1 // loop_footer
      %s35 = sadd.s32 1, %s31
    $region7: #{sequential_with_adain.1} parent=1 // loop_footer_branch
      %30 = sbr.rel target = $region3
    $region8: #{sequential_with_adain.1} parent=1 // loop_exit
      _
    %2314 = vsyncpa [#allocation4], 1
    %s2315 = scalar_lea.sflag [#allocation4], 1
    %2316 = vsyncpa %s2315, 1
    %2317 = vsyncpa [#allocation7], 1
    %s2318 = scalar_lea.sflag [#allocation7], 1
    %2319 = vsyncpa %s2318, 1
    %2320 = vsyncpa [#allocation10], 1
    %s2321 = scalar_lea.sflag [#allocation10], 1
    %2322 = vsyncpa %s2321, 1
    %2323 = vsyncpa [#allocation13], 1
    %2324 = vsyncpa [#allocation16], 1
    %2325 = vsyncpa [#allocation19], 1
    %2326 = vsyncpa [#allocation5], 1
    %s2327 = scalar_lea.sflag [#allocation5], 1
    %2328 = vsyncpa %s2327, 1

</llo_original>
